<compile_context>
chip_gen: v7x
topology: tpu7x:2x2x1
jax: 0.10.0
libtpu: 0.0.40
codegen_flags: <defaults>
</compile_context>

<pallas_src>
import functools

import jax
import jax.numpy as jnp
from jax import lax
from jax.experimental import pallas as pl
from jax.experimental.pallas import tpu as pltpu

_LANES = 128


def _round_up(x, m):
    return (x + m - 1) // m * m


def _pick_batch_tile(B, L, target_rows=512):
    """Batch tile: block rows divisible by 8 (or full array), >=2 grid steps
    when possible (v7x has 2 TensorCores), rows near target for DMA efficiency."""
    divisors = [d for d in range(1, B + 1) if B % d == 0]
    cands = [d for d in divisors if (d * L) % 8 == 0] or [B]
    pref = [d for d in cands if B // d >= 2] or cands
    return min(pref, key=lambda d: abs(d * L - target_rows))


def _vmem_capacity_bytes():
    try:
        return int(pltpu.get_tpu_info().vmem_capacity_bytes)
    except Exception:
        return 64 * 1024 * 1024            # conservative (v7x per-TC VMEM)


# ----------------------------------------------------------------------------
# Fused Pallas kernel: all TemporalBlocks for one batch tile
# ----------------------------------------------------------------------------
def _tcn_fused_kernel(*refs, dilations, ds_index, seq_len, ksize, n_ds):
    """refs = (x, W1_all, b1_all, W2_all, b2_all, [Wd_all, bd_all], out)

    x/out: (R, CP) float32 with R = batch_tile * seq_len rows (batch-major,
    time-minor) and CP = 128-padded channels on the lane axis.
    W1_all/W2_all: (n_layers, K*CP, CP) bf16 (taps stacked on the contraction
    dim).  b1_all/b2_all: (n_layers, 1, CP) f32.  Wd_all: (n_ds, CP, CP) bf16.
    """
    x_ref, w1_ref, b1_ref, w2_ref, b2_ref = refs[:5]
    if n_ds:
        wd_ref, bd_ref = refs[5], refs[6]
        o_ref = refs[7]
    else:
        o_ref = refs[5]

    R, CP = x_ref.shape
    # Row position inside its own sequence (hoisted; reused for every mask).
    # Rolled-in rows from a neighbouring sequence always land on t < shift and
    # are masked to zero, which is exactly the causal zero padding.
    tpos = lax.broadcasted_iota(jnp.int32, (R, 1), 0) % seq_len

    # Hoist causal masks: one (R, 1) predicate per distinct nonzero shift,
    # shared by conv1/conv2 of a layer and by layers with equal dilation.
    shift_set = sorted({(ksize - 1 - k) * d for d in dilations
                        for k in range(ksize)} - {0})
    masks = {s: tpos >= s for s in shift_set}

    def causal_stack(v, dil):
        """(R, CP) f32 -> (R, K*CP) bf16: concat of causally shifted copies,
        tap-major, matching the (K, CP, CP) -> (K*CP, CP) weight reshape."""
        cols = []
        for k in range(ksize):
            s = (ksize - 1 - k) * dil            # static shift
            if s == 0:
                cols.append(v.astype(jnp.bfloat16))
            else:
                sh = pltpu.roll(v, shift=s, axis=0)
                cols.append(jnp.where(masks[s], sh, 0.0).astype(jnp.bfloat16))
        return jnp.concatenate(cols, axis=-1) if ksize > 1 else cols[0]

    h = x_ref[...]                               # f32 activation / residual path
    for i, dil in enumerate(dilations):          # n_layers is small -> unrolled
        # conv1 + chomp + relu (one bf16 MXU pass over the stacked taps)
        hs = causal_stack(h, dil)
        y = jnp.dot(hs, w1_ref[i], preferred_element_type=jnp.float32) + b1_ref[i]
        y = jnp.maximum(y, 0.0)
        # conv2 + chomp + relu
        ys = causal_stack(y, dil)
        y = jnp.dot(ys, w2_ref[i], preferred_element_type=jnp.float32) + b2_ref[i]
        y = jnp.maximum(y, 0.0)
        # residual (1x1 downsample only where Cin != Cout)
        j = ds_index[i]
        if j >= 0:
            res = jnp.dot(h.astype(jnp.bfloat16), wd_ref[j],
                          preferred_element_type=jnp.float32) + bd_ref[j]
        else:
            res = h
        h = jnp.maximum(y + res, 0.0)            # final relu of the block

    o_ref[...] = h


# ----------------------------------------------------------------------------
# Wrapper: pack/pad params, build lane-dense layout, single pallas_call
# ----------------------------------------------------------------------------
def tcn_forward(x_ncl, params, *, batch_tile=None):
    """x_ncl: (B, C_in, L) float32 (PyTorch NCL).  Returns (B, C_last, L) f32."""
    B, c_in, L = x_ncl.shape
    ksize = params[0]["W1"].shape[2]
    chans = [c_in] + [int(p["W1"].shape[0]) for p in params]
    CP = _round_up(max(chans), _LANES)           # pad channels to lane width
    dilations = tuple(int(p["dilation"]) for p in params)

    w1s, b1s, w2s, b2s = [], [], [], []
    wds, bds, ds_index = [], [], []
    for p in params:
        cout, cin, _ = p["W1"].shape
        w1 = jnp.transpose(p["W1"], (2, 1, 0))                       # (K, Cin, Cout)
        w1 = jnp.pad(w1, ((0, 0), (0, CP - cin), (0, CP - cout)))
        w1s.append(w1.reshape(ksize * CP, CP))
        b1s.append(jnp.pad(p["b1"], (0, CP - cout))[None, :])
        w2 = jnp.transpose(p["W2"], (2, 1, 0))                       # (K, Cout, Cout)
        w2 = jnp.pad(w2, ((0, 0), (0, CP - cout), (0, CP - cout)))
        w2s.append(w2.reshape(ksize * CP, CP))
        b2s.append(jnp.pad(p["b2"], (0, CP - cout))[None, :])
        if p["Wd"] is not None:
            wd = jnp.transpose(p["Wd"][:, :, 0], (1, 0))             # (Cin, Cout)
            wds.append(jnp.pad(wd, ((0, CP - cin), (0, CP - cout))))
            bds.append(jnp.pad(p["bd"], (0, CP - cout))[None, :])
            ds_index.append(len(wds) - 1)
        else:
            ds_index.append(-1)
    n_ds = len(wds)

    w1_all = jnp.stack(w1s).astype(jnp.bfloat16)    # (n_layers, K*CP, CP)
    w2_all = jnp.stack(w2s).astype(jnp.bfloat16)
    b1_all = jnp.stack(b1s)                         # (n_layers, 1, CP) f32
    b2_all = jnp.stack(b2s)

    # (B, C, L) -> (B*L, CP): time on sublanes, 128-padded channels on lanes.
    x = jnp.transpose(x_ncl, (0, 2, 1)).astype(jnp.float32)
    x = jnp.pad(x, ((0, 0), (0, 0), (0, CP - c_in))).reshape(B * L, CP)

    bt = batch_tile or _pick_batch_tile(B, L)
    R = bt * L
    grid = (B // bt,)

    kernel = functools.partial(
        _tcn_fused_kernel, dilations=dilations, ds_index=tuple(ds_index),
        seq_len=L, ksize=ksize, n_ds=n_ds)

    def const_spec(shape):
        return pl.BlockSpec(shape, lambda b, _s=shape: (0,) * len(_s))

    in_specs = [pl.BlockSpec((R, CP), lambda b: (b, 0)),
                const_spec(w1_all.shape), const_spec(b1_all.shape),
                const_spec(w2_all.shape), const_spec(b2_all.shape)]
    args = [x, w1_all, b1_all, w2_all, b2_all]
    if n_ds:
        wd_all = jnp.stack(wds).astype(jnp.bfloat16)  # (n_ds, CP, CP)
        bd_all = jnp.stack(bds)                       # (n_ds, 1, CP) f32
        in_specs += [const_spec(wd_all.shape), const_spec(bd_all.shape)]
        args += [wd_all, bd_all]

    # Rough VMEM budget: pipelined x/out blocks + weights + live temporaries.
    weight_bytes = sum(int(a.size) * a.dtype.itemsize for a in args[1:])
    est = 4 * R * CP * 4 + 2 * weight_bytes + 6 * R * ksize * CP * 4
    vmem_limit = None
    if est > 32 * 1024 * 1024:
        # TODO(synk): for very long L on v7x (64 MiB VMEM) tile L on a second
        # grid axis with a (K-1)*max_dilation halo instead of whole-sequence blocks.
        cap = int(0.85 * _vmem_capacity_bytes())
        vmem_limit = min(int(est * 1.5), cap)

    out = pl.pallas_call(
        kernel,
        out_shape=jax.ShapeDtypeStruct((B * L, CP), jnp.float32),
        grid=grid,
        in_specs=in_specs,
        out_specs=pl.BlockSpec((R, CP), lambda b: (b, 0)),
        compiler_params=pltpu.CompilerParams(
            dimension_semantics=("parallel",),
            vmem_limit_bytes=vmem_limit),
    )(*args)

    c_last = chans[-1]
    out = out.reshape(B, L, CP)[:, :, :c_last]
    return jnp.transpose(out, (0, 2, 1))            # -> (B, C_last, L)


# ----------------------------------------------------------------------------
# Parameter construction (deterministic, synthetic) + weight_norm semantics
# ----------------------------------------------------------------------------
def _weight_norm(v):
    """PyTorch weight_norm (dim=0): W = g * v / ||v||, norm over (Cin, K) per
    output channel.  At wrap time g = ||v||, so W == v numerically."""
    norm = jnp.sqrt(jnp.sum(v * v, axis=(1, 2), keepdims=True))
    return norm * v / norm


def make_tcn_params(key, num_inputs, num_channels, kernel_size):
    params = []
    for i, out_c in enumerate(num_channels):
        in_c = num_inputs if i == 0 else num_channels[i - 1]
        d = 2 ** i
        key, k1, k2, k3, k4, k5, k6 = jax.random.split(key, 7)
        v1 = 0.01 * jax.random.normal(k1, (out_c, in_c, kernel_size), jnp.float32)
        v2 = 0.01 * jax.random.normal(k2, (out_c, out_c, kernel_size), jnp.float32)
        b1 = 0.01 * jax.random.normal(k3, (out_c,), jnp.float32)
        b2 = 0.01 * jax.random.normal(k4, (out_c,), jnp.float32)
        W1, W2 = _weight_norm(v1), _weight_norm(v2)
        if in_c != out_c:
            Wd = 0.01 * jax.random.normal(k5, (out_c, in_c, 1), jnp.float32)
            bd = 0.01 * jax.random.normal(k6, (out_c,), jnp.float32)
        else:
            Wd, bd = None, None
        params.append(dict(W1=W1, b1=b1, W2=W2, b2=b2, Wd=Wd, bd=bd, dilation=d))
    return params


# ----------------------------------------------------------------------------
# Pure-JAX reference (lax.conv, f32) for correctness checking
# ----------------------------------------------------------------------------
def tcn_reference(x_ncl, params, kernel_size):
    def causal_conv(x, W, b, d):
        pad = (kernel_size - 1) * d
        y = lax.conv_general_dilated(
            x, W, window_strides=(1,), padding=[(pad, pad)],
            rhs_dilation=(d,), dimension_numbers=("NCH", "OIH", "NCH"))
        y = y[:, :, :x.shape[2]]                            # Chomp1d
        return y + b[None, :, None]

    h = x_ncl
    for p in params:
        d = p["dilation"]
        out = jax.nn.relu(causal_conv(h, p["W1"], p["b1"], d))
        out = jax.nn.relu(causal_conv(out, p["W2"], p["b2"], d))
        if p["Wd"] is not None:
            res = lax.conv_general_dilated(
                h, p["Wd"], window_strides=(1,), padding=[(0, 0)],
                dimension_numbers=("NCH", "OIH", "NCH")) + p["bd"][None, :, None]
        else:
            res = h
        h = jax.nn.relu(out + res)
    return h


# ----------------------------------------------------------------------------
if __name__ == "__main__":
    B, num_inputs, L = 2, 4, 16
    num_channels = [8, 8, 16]
    kernel_size = 2

    key = jax.random.PRNGKey(0)
    kx, kp = jax.random.split(key)
    x = jax.random.normal(kx, (B, num_inputs, L), jnp.float32)   # PyTorch NCL

    params = make_tcn_params(kp, num_inputs, num_channels, kernel_size)

    out = jax.block_until_ready(tcn_forward(x, params))
    ref = jax.block_until_ready(tcn_reference(x, params, kernel_size))

    assert out.shape == (B, num_channels[-1], L), out.shape
    max_err = float(jnp.max(jnp.abs(out - ref)))
    # bf16 matmul inputs (f32 accumulation) -> loosened tolerance vs f32 reference
    assert jnp.allclose(out, ref, rtol=1e-2, atol=1e-2), max_err

    print("KERNEL_OK")
</pallas_src>

<mosaic_0001>
module attributes {stable_mosaic.version = 11 : i64} {
  func.func @_tcn_fused_kernel(%arg0: i32, %arg1: memref<16x128xf32, #tpu.memory_space<vmem>>, %arg2: memref<3x256x128xbf16, #tpu.memory_space<vmem>>, %arg3: memref<3x1x128xf32, #tpu.memory_space<vmem>>, %arg4: memref<3x256x128xbf16, #tpu.memory_space<vmem>>, %arg5: memref<3x1x128xf32, #tpu.memory_space<vmem>>, %arg6: memref<2x128x128xbf16, #tpu.memory_space<vmem>>, %arg7: memref<2x1x128xf32, #tpu.memory_space<vmem>>, %arg8: memref<16x128xf32, #tpu.memory_space<vmem>>) attributes {dimension_semantics = [#tpu.dimension_semantics<parallel>], iteration_bounds = array<i64: 2>, scalar_prefetch = 0 : i64, scratch_operands = 0 : i64, tpu.core_type = #tpu.core_type<tc>, window_params = [{transform_indices = @transform_0, window_bounds = array<i64: 16, 128>}, {pipeline_mode = #tpu.pipeline_mode<synchronous>, transform_indices = @transform_1, window_bounds = array<i64: 3, 256, 128>}, {pipeline_mode = #tpu.pipeline_mode<synchronous>, transform_indices = @transform_2, window_bounds = array<i64: 3, 1, 128>}, {pipeline_mode = #tpu.pipeline_mode<synchronous>, transform_indices = @transform_3, window_bounds = array<i64: 3, 256, 128>}, {pipeline_mode = #tpu.pipeline_mode<synchronous>, transform_indices = @transform_4, window_bounds = array<i64: 3, 1, 128>}, {pipeline_mode = #tpu.pipeline_mode<synchronous>, transform_indices = @transform_5, window_bounds = array<i64: 2, 128, 128>}, {pipeline_mode = #tpu.pipeline_mode<synchronous>, transform_indices = @transform_6, window_bounds = array<i64: 2, 1, 128>}, {transform_indices = @transform_7, window_bounds = array<i64: 16, 128>}]} {
    %0 = tpu.iota {dimensions = array<i32: 0>} : vector<16x1xi32>
    %c16_i32 = arith.constant 16 : i32
    %c0_i32 = arith.constant 0 : i32
    %1 = arith.cmpi eq, %c16_i32, %c0_i32 : i32
    %c1_i32 = arith.constant 1 : i32
    %2 = arith.select %1, %c1_i32, %c16_i32 : i32
    %3 = vector.broadcast %2 : i32 to vector<16x1xi32>
    %4 = arith.remsi %0, %3 : vector<16x1xi32>
    %c0_i32_0 = arith.constant 0 : i32
    %5 = vector.broadcast %c0_i32_0 : i32 to vector<16x1xi32>
    %6 = arith.cmpi ne, %4, %5 : vector<16x1xi32>
    %c0_i32_1 = arith.constant 0 : i32
    %7 = vector.broadcast %c0_i32_1 : i32 to vector<16x1xi32>
    %8 = arith.cmpi slt, %4, %7 : vector<16x1xi32>
    %c0_i32_2 = arith.constant 0 : i32
    %9 = arith.cmpi slt, %2, %c0_i32_2 : i32
    %10 = vector.broadcast %9 : i1 to vector<16x1xi1>
    %11 = vector.broadcast %10 : vector<16x1xi1> to vector<16x1xi1>
    %12 = arith.xori %8, %11 : vector<16x1xi1>
    %13 = arith.andi %12, %6 : vector<16x1xi1>
    %14 = vector.broadcast %2 : i32 to vector<16x1xi32>
    %15 = arith.addi %4, %14 : vector<16x1xi32>
    %16 = arith.select %13, %15, %4 : vector<16x1xi1>, vector<16x1xi32>
    %c1_i32_3 = arith.constant 1 : i32
    %17 = vector.broadcast %c1_i32_3 : i32 to vector<16x1xi32>
    %18 = arith.cmpi sge, %16, %17 : vector<16x1xi32>
    %c2_i32 = arith.constant 2 : i32
    %19 = vector.broadcast %c2_i32 : i32 to vector<16x1xi32>
    %20 = arith.cmpi sge, %16, %19 : vector<16x1xi32>
    %c4_i32 = arith.constant 4 : i32
    %21 = vector.broadcast %c4_i32 : i32 to vector<16x1xi32>
    %22 = arith.cmpi sge, %16, %21 : vector<16x1xi32>
    %c0 = arith.constant 0 : index
    %c0_4 = arith.constant 0 : index
    %23 = vector.load %arg1[%c0, %c0_4] : memref<16x128xf32, #tpu.memory_space<vmem>>, vector<16x128xf32>
    %c1_i32_5 = arith.constant 1 : i32
    %24 = tpu.dynamic_rotate %23 by %c1_i32_5 dim 0 : vector<16x128xf32>, i32 -> vector<16x128xf32>
    %cst = arith.constant 0.000000e+00 : f32
    %25 = vector.shape_cast %18 : vector<16x1xi1> to vector<16x1xi1>
    %26 = vector.broadcast %25 : vector<16x1xi1> to vector<16x128xi1>
    %27 = vector.broadcast %cst : f32 to vector<16x128xf32>
    %28 = arith.select %26, %24, %27 : vector<16x128xi1>, vector<16x128xf32>
    %29 = arith.truncf %28 : vector<16x128xf32> to vector<16x128xbf16>
    %30 = arith.truncf %23 : vector<16x128xf32> to vector<16x128xbf16>
    %31 = tpu.concatenate %29, %30 in 1 : vector<16x128xbf16>, vector<16x128xbf16> -> vector<16x256xbf16>
    %c0_6 = arith.constant 0 : index
    %c0_7 = arith.constant 0 : index
    %c0_8 = arith.constant 0 : index
    %32 = vector.load %arg2[%c0_6, %c0_7, %c0_8] : memref<3x256x128xbf16, #tpu.memory_space<vmem>>, vector<1x256x128xbf16>
    %33 = vector.shape_cast %32 : vector<1x256x128xbf16> to vector<256x128xbf16>
    %cst_9 = arith.constant dense<0.000000e+00> : vector<16x128xf32>
    %34 = tpu.matmul %31, %33, %cst_9 {dimension_numbers = #tpu.dot_dimension_numbers<[1], [0], [0], [1], [0, 0, 1, 1], [], []>} : vector<16x256xbf16>, vector<256x128xbf16>, vector<16x128xf32> -> vector<16x128xf32>
    %c0_10 = arith.constant 0 : index
    %c0_11 = arith.constant 0 : index
    %c0_12 = arith.constant 0 : index
    %35 = vector.load %arg3[%c0_10, %c0_11, %c0_12] : memref<3x1x128xf32, #tpu.memory_space<vmem>>, vector<1x1x128xf32>
    %36 = vector.shape_cast %35 : vector<1x1x128xf32> to vector<1x128xf32>
    %37 = vector.broadcast %36 : vector<1x128xf32> to vector<16x128xf32>
    %38 = arith.addf %34, %37 : vector<16x128xf32>
    %cst_13 = arith.constant 0.000000e+00 : f32
    %39 = vector.broadcast %cst_13 : f32 to vector<16x128xf32>
    %40 = arith.maximumf %38, %39 : vector<16x128xf32>
    %c1_i32_14 = arith.constant 1 : i32
    %41 = tpu.dynamic_rotate %40 by %c1_i32_14 dim 0 : vector<16x128xf32>, i32 -> vector<16x128xf32>
    %cst_15 = arith.constant 0.000000e+00 : f32
    %42 = vector.shape_cast %18 : vector<16x1xi1> to vector<16x1xi1>
    %43 = vector.broadcast %42 : vector<16x1xi1> to vector<16x128xi1>
    %44 = vector.broadcast %cst_15 : f32 to vector<16x128xf32>
    %45 = arith.select %43, %41, %44 : vector<16x128xi1>, vector<16x128xf32>
    %46 = arith.truncf %45 : vector<16x128xf32> to vector<16x128xbf16>
    %47 = arith.truncf %40 : vector<16x128xf32> to vector<16x128xbf16>
    %48 = tpu.concatenate %46, %47 in 1 : vector<16x128xbf16>, vector<16x128xbf16> -> vector<16x256xbf16>
    %c0_16 = arith.constant 0 : index
    %c0_17 = arith.constant 0 : index
    %c0_18 = arith.constant 0 : index
    %49 = vector.load %arg4[%c0_16, %c0_17, %c0_18] : memref<3x256x128xbf16, #tpu.memory_space<vmem>>, vector<1x256x128xbf16>
    %50 = vector.shape_cast %49 : vector<1x256x128xbf16> to vector<256x128xbf16>
    %cst_19 = arith.constant dense<0.000000e+00> : vector<16x128xf32>
    %51 = tpu.matmul %48, %50, %cst_19 {dimension_numbers = #tpu.dot_dimension_numbers<[1], [0], [0], [1], [0, 0, 1, 1], [], []>} : vector<16x256xbf16>, vector<256x128xbf16>, vector<16x128xf32> -> vector<16x128xf32>
    %c0_20 = arith.constant 0 : index
    %c0_21 = arith.constant 0 : index
    %c0_22 = arith.constant 0 : index
    %52 = vector.load %arg5[%c0_20, %c0_21, %c0_22] : memref<3x1x128xf32, #tpu.memory_space<vmem>>, vector<1x1x128xf32>
    %53 = vector.shape_cast %52 : vector<1x1x128xf32> to vector<1x128xf32>
    %54 = vector.broadcast %53 : vector<1x128xf32> to vector<16x128xf32>
    %55 = arith.addf %51, %54 : vector<16x128xf32>
    %cst_23 = arith.constant 0.000000e+00 : f32
    %56 = vector.broadcast %cst_23 : f32 to vector<16x128xf32>
    %57 = arith.maximumf %55, %56 : vector<16x128xf32>
    %58 = arith.truncf %23 : vector<16x128xf32> to vector<16x128xbf16>
    %c0_24 = arith.constant 0 : index
    %c0_25 = arith.constant 0 : index
    %c0_26 = arith.constant 0 : index
    %59 = vector.load %arg6[%c0_24, %c0_25, %c0_26] : memref<2x128x128xbf16, #tpu.memory_space<vmem>>, vector<1x128x128xbf16>
    %60 = vector.shape_cast %59 : vector<1x128x128xbf16> to vector<128x128xbf16>
    %cst_27 = arith.constant dense<0.000000e+00> : vector<16x128xf32>
    %61 = tpu.matmul %58, %60, %cst_27 {dimension_numbers = #tpu.dot_dimension_numbers<[1], [0], [0], [1], [0, 0, 1, 1], [], []>} : vector<16x128xbf16>, vector<128x128xbf16>, vector<16x128xf32> -> vector<16x128xf32>
    %c0_28 = arith.constant 0 : index
    %c0_29 = arith.constant 0 : index
    %c0_30 = arith.constant 0 : index
    %62 = vector.load %arg7[%c0_28, %c0_29, %c0_30] : memref<2x1x128xf32, #tpu.memory_space<vmem>>, vector<1x1x128xf32>
    %63 = vector.shape_cast %62 : vector<1x1x128xf32> to vector<1x128xf32>
    %64 = vector.broadcast %63 : vector<1x128xf32> to vector<16x128xf32>
    %65 = arith.addf %61, %64 : vector<16x128xf32>
    %66 = arith.addf %57, %65 : vector<16x128xf32>
    %cst_31 = arith.constant 0.000000e+00 : f32
    %67 = vector.broadcast %cst_31 : f32 to vector<16x128xf32>
    %68 = arith.maximumf %66, %67 : vector<16x128xf32>
    %c2_i32_32 = arith.constant 2 : i32
    %69 = tpu.dynamic_rotate %68 by %c2_i32_32 dim 0 : vector<16x128xf32>, i32 -> vector<16x128xf32>
    %cst_33 = arith.constant 0.000000e+00 : f32
    %70 = vector.shape_cast %20 : vector<16x1xi1> to vector<16x1xi1>
    %71 = vector.broadcast %70 : vector<16x1xi1> to vector<16x128xi1>
    %72 = vector.broadcast %cst_33 : f32 to vector<16x128xf32>
    %73 = arith.select %71, %69, %72 : vector<16x128xi1>, vector<16x128xf32>
    %74 = arith.truncf %73 : vector<16x128xf32> to vector<16x128xbf16>
    %75 = arith.truncf %68 : vector<16x128xf32> to vector<16x128xbf16>
    %76 = tpu.concatenate %74, %75 in 1 : vector<16x128xbf16>, vector<16x128xbf16> -> vector<16x256xbf16>
    %c1 = arith.constant 1 : index
    %c0_34 = arith.constant 0 : index
    %c0_35 = arith.constant 0 : index
    %77 = vector.load %arg2[%c1, %c0_34, %c0_35] : memref<3x256x128xbf16, #tpu.memory_space<vmem>>, vector<1x256x128xbf16>
    %78 = vector.shape_cast %77 : vector<1x256x128xbf16> to vector<256x128xbf16>
    %cst_36 = arith.constant dense<0.000000e+00> : vector<16x128xf32>
    %79 = tpu.matmul %76, %78, %cst_36 {dimension_numbers = #tpu.dot_dimension_numbers<[1], [0], [0], [1], [0, 0, 1, 1], [], []>} : vector<16x256xbf16>, vector<256x128xbf16>, vector<16x128xf32> -> vector<16x128xf32>
    %c1_37 = arith.constant 1 : index
    %c0_38 = arith.constant 0 : index
    %c0_39 = arith.constant 0 : index
    %80 = vector.load %arg3[%c1_37, %c0_38, %c0_39] : memref<3x1x128xf32, #tpu.memory_space<vmem>>, vector<1x1x128xf32>
    %81 = vector.shape_cast %80 : vector<1x1x128xf32> to vector<1x128xf32>
    %82 = vector.broadcast %81 : vector<1x128xf32> to vector<16x128xf32>
    %83 = arith.addf %79, %82 : vector<16x128xf32>
    %cst_40 = arith.constant 0.000000e+00 : f32
    %84 = vector.broadcast %cst_40 : f32 to vector<16x128xf32>
    %85 = arith.maximumf %83, %84 : vector<16x128xf32>
    %c2_i32_41 = arith.constant 2 : i32
    %86 = tpu.dynamic_rotate %85 by %c2_i32_41 dim 0 : vector<16x128xf32>, i32 -> vector<16x128xf32>
    %cst_42 = arith.constant 0.000000e+00 : f32
    %87 = vector.shape_cast %20 : vector<16x1xi1> to vector<16x1xi1>
    %88 = vector.broadcast %87 : vector<16x1xi1> to vector<16x128xi1>
    %89 = vector.broadcast %cst_42 : f32 to vector<16x128xf32>
    %90 = arith.select %88, %86, %89 : vector<16x128xi1>, vector<16x128xf32>
    %91 = arith.truncf %90 : vector<16x128xf32> to vector<16x128xbf16>
    %92 = arith.truncf %85 : vector<16x128xf32> to vector<16x128xbf16>
    %93 = tpu.concatenate %91, %92 in 1 : vector<16x128xbf16>, vector<16x128xbf16> -> vector<16x256xbf16>
    %c1_43 = arith.constant 1 : index
    %c0_44 = arith.constant 0 : index
    %c0_45 = arith.constant 0 : index
    %94 = vector.load %arg4[%c1_43, %c0_44, %c0_45] : memref<3x256x128xbf16, #tpu.memory_space<vmem>>, vector<1x256x128xbf16>
    %95 = vector.shape_cast %94 : vector<1x256x128xbf16> to vector<256x128xbf16>
    %cst_46 = arith.constant dense<0.000000e+00> : vector<16x128xf32>
    %96 = tpu.matmul %93, %95, %cst_46 {dimension_numbers = #tpu.dot_dimension_numbers<[1], [0], [0], [1], [0, 0, 1, 1], [], []>} : vector<16x256xbf16>, vector<256x128xbf16>, vector<16x128xf32> -> vector<16x128xf32>
    %c1_47 = arith.constant 1 : index
    %c0_48 = arith.constant 0 : index
    %c0_49 = arith.constant 0 : index
    %97 = vector.load %arg5[%c1_47, %c0_48, %c0_49] : memref<3x1x128xf32, #tpu.memory_space<vmem>>, vector<1x1x128xf32>
    %98 = vector.shape_cast %97 : vector<1x1x128xf32> to vector<1x128xf32>
    %99 = vector.broadcast %98 : vector<1x128xf32> to vector<16x128xf32>
    %100 = arith.addf %96, %99 : vector<16x128xf32>
    %cst_50 = arith.constant 0.000000e+00 : f32
    %101 = vector.broadcast %cst_50 : f32 to vector<16x128xf32>
    %102 = arith.maximumf %100, %101 : vector<16x128xf32>
    %103 = arith.addf %102, %68 : vector<16x128xf32>
    %cst_51 = arith.constant 0.000000e+00 : f32
    %104 = vector.broadcast %cst_51 : f32 to vector<16x128xf32>
    %105 = arith.maximumf %103, %104 : vector<16x128xf32>
    %c4_i32_52 = arith.constant 4 : i32
    %106 = tpu.dynamic_rotate %105 by %c4_i32_52 dim 0 : vector<16x128xf32>, i32 -> vector<16x128xf32>
    %cst_53 = arith.constant 0.000000e+00 : f32
    %107 = vector.shape_cast %22 : vector<16x1xi1> to vector<16x1xi1>
    %108 = vector.broadcast %107 : vector<16x1xi1> to vector<16x128xi1>
    %109 = vector.broadcast %cst_53 : f32 to vector<16x128xf32>
    %110 = arith.select %108, %106, %109 : vector<16x128xi1>, vector<16x128xf32>
    %111 = arith.truncf %110 : vector<16x128xf32> to vector<16x128xbf16>
    %112 = arith.truncf %105 : vector<16x128xf32> to vector<16x128xbf16>
    %113 = tpu.concatenate %111, %112 in 1 : vector<16x128xbf16>, vector<16x128xbf16> -> vector<16x256xbf16>
    %c2 = arith.constant 2 : index
    %c0_54 = arith.constant 0 : index
    %c0_55 = arith.constant 0 : index
    %114 = vector.load %arg2[%c2, %c0_54, %c0_55] : memref<3x256x128xbf16, #tpu.memory_space<vmem>>, vector<1x256x128xbf16>
    %115 = vector.shape_cast %114 : vector<1x256x128xbf16> to vector<256x128xbf16>
    %cst_56 = arith.constant dense<0.000000e+00> : vector<16x128xf32>
    %116 = tpu.matmul %113, %115, %cst_56 {dimension_numbers = #tpu.dot_dimension_numbers<[1], [0], [0], [1], [0, 0, 1, 1], [], []>} : vector<16x256xbf16>, vector<256x128xbf16>, vector<16x128xf32> -> vector<16x128xf32>
    %c2_57 = arith.constant 2 : index
    %c0_58 = arith.constant 0 : index
    %c0_59 = arith.constant 0 : index
    %117 = vector.load %arg3[%c2_57, %c0_58, %c0_59] : memref<3x1x128xf32, #tpu.memory_space<vmem>>, vector<1x1x128xf32>
    %118 = vector.shape_cast %117 : vector<1x1x128xf32> to vector<1x128xf32>
    %119 = vector.broadcast %118 : vector<1x128xf32> to vector<16x128xf32>
    %120 = arith.addf %116, %119 : vector<16x128xf32>
    %cst_60 = arith.constant 0.000000e+00 : f32
    %121 = vector.broadcast %cst_60 : f32 to vector<16x128xf32>
    %122 = arith.maximumf %120, %121 : vector<16x128xf32>
    %c4_i32_61 = arith.constant 4 : i32
    %123 = tpu.dynamic_rotate %122 by %c4_i32_61 dim 0 : vector<16x128xf32>, i32 -> vector<16x128xf32>
    %cst_62 = arith.constant 0.000000e+00 : f32
    %124 = vector.shape_cast %22 : vector<16x1xi1> to vector<16x1xi1>
    %125 = vector.broadcast %124 : vector<16x1xi1> to vector<16x128xi1>
    %126 = vector.broadcast %cst_62 : f32 to vector<16x128xf32>
    %127 = arith.select %125, %123, %126 : vector<16x128xi1>, vector<16x128xf32>
    %128 = arith.truncf %127 : vector<16x128xf32> to vector<16x128xbf16>
    %129 = arith.truncf %122 : vector<16x128xf32> to vector<16x128xbf16>
    %130 = tpu.concatenate %128, %129 in 1 : vector<16x128xbf16>, vector<16x128xbf16> -> vector<16x256xbf16>
    %c2_63 = arith.constant 2 : index
    %c0_64 = arith.constant 0 : index
    %c0_65 = arith.constant 0 : index
    %131 = vector.load %arg4[%c2_63, %c0_64, %c0_65] : memref<3x256x128xbf16, #tpu.memory_space<vmem>>, vector<1x256x128xbf16>
    %132 = vector.shape_cast %131 : vector<1x256x128xbf16> to vector<256x128xbf16>
    %cst_66 = arith.constant dense<0.000000e+00> : vector<16x128xf32>
    %133 = tpu.matmul %130, %132, %cst_66 {dimension_numbers = #tpu.dot_dimension_numbers<[1], [0], [0], [1], [0, 0, 1, 1], [], []>} : vector<16x256xbf16>, vector<256x128xbf16>, vector<16x128xf32> -> vector<16x128xf32>
    %c2_67 = arith.constant 2 : index
    %c0_68 = arith.constant 0 : index
    %c0_69 = arith.constant 0 : index
    %134 = vector.load %arg5[%c2_67, %c0_68, %c0_69] : memref<3x1x128xf32, #tpu.memory_space<vmem>>, vector<1x1x128xf32>
    %135 = vector.shape_cast %134 : vector<1x1x128xf32> to vector<1x128xf32>
    %136 = vector.broadcast %135 : vector<1x128xf32> to vector<16x128xf32>
    %137 = arith.addf %133, %136 : vector<16x128xf32>
    %cst_70 = arith.constant 0.000000e+00 : f32
    %138 = vector.broadcast %cst_70 : f32 to vector<16x128xf32>
    %139 = arith.maximumf %137, %138 : vector<16x128xf32>
    %140 = arith.truncf %105 : vector<16x128xf32> to vector<16x128xbf16>
    %c1_71 = arith.constant 1 : index
    %c0_72 = arith.constant 0 : index
    %c0_73 = arith.constant 0 : index
    %141 = vector.load %arg6[%c1_71, %c0_72, %c0_73] : memref<2x128x128xbf16, #tpu.memory_space<vmem>>, vector<1x128x128xbf16>
    %142 = vector.shape_cast %141 : vector<1x128x128xbf16> to vector<128x128xbf16>
    %cst_74 = arith.constant dense<0.000000e+00> : vector<16x128xf32>
    %143 = tpu.matmul %140, %142, %cst_74 {dimension_numbers = #tpu.dot_dimension_numbers<[1], [0], [0], [1], [0, 0, 1, 1], [], []>} : vector<16x128xbf16>, vector<128x128xbf16>, vector<16x128xf32> -> vector<16x128xf32>
    %c1_75 = arith.constant 1 : index
    %c0_76 = arith.constant 0 : index
    %c0_77 = arith.constant 0 : index
    %144 = vector.load %arg7[%c1_75, %c0_76, %c0_77] : memref<2x1x128xf32, #tpu.memory_space<vmem>>, vector<1x1x128xf32>
    %145 = vector.shape_cast %144 : vector<1x1x128xf32> to vector<1x128xf32>
    %146 = vector.broadcast %145 : vector<1x128xf32> to vector<16x128xf32>
    %147 = arith.addf %143, %146 : vector<16x128xf32>
    %148 = arith.addf %139, %147 : vector<16x128xf32>
    %cst_78 = arith.constant 0.000000e+00 : f32
    %149 = vector.broadcast %cst_78 : f32 to vector<16x128xf32>
    %150 = arith.maximumf %148, %149 : vector<16x128xf32>
    %c0_79 = arith.constant 0 : index
    %c0_80 = arith.constant 0 : index
    %151 = vector.load %arg8[%c0_79, %c0_80] : memref<16x128xf32, #tpu.memory_space<vmem>>, vector<16x128xf32>
    tpu.vector_store %arg8[%c0_79, %c0_80], %150 {strides = array<i32>} : memref<16x128xf32, #tpu.memory_space<vmem>>, vector<16x128xf32>,
    return
  }
  func.func @transform_0(%arg0: i32) -> (i32, i32) {
    %c0_i32 = arith.constant 0 : i32
    %c0_i32_0 = arith.constant 0 : i32
    return %arg0, %c0_i32 : i32, i32
  }
  func.func @transform_1(%arg0: i32) -> (i32, i32, i32) {
    %c0_i32 = arith.constant 0 : i32
    %c0_i32_0 = arith.constant 0 : i32
    %c0_i32_1 = arith.constant 0 : i32
    %c0_i32_2 = arith.constant 0 : i32
    return %c0_i32, %c0_i32_0, %c0_i32_1 : i32, i32, i32
  }
  func.func @transform_2(%arg0: i32) -> (i32, i32, i32) {
    %c0_i32 = arith.constant 0 : i32
    %c0_i32_0 = arith.constant 0 : i32
    %c0_i32_1 = arith.constant 0 : i32
    %c0_i32_2 = arith.constant 0 : i32
    return %c0_i32, %c0_i32_0, %c0_i32_1 : i32, i32, i32
  }
  func.func @transform_3(%arg0: i32) -> (i32, i32, i32) {
    %c0_i32 = arith.constant 0 : i32
    %c0_i32_0 = arith.constant 0 : i32
    %c0_i32_1 = arith.constant 0 : i32
    %c0_i32_2 = arith.constant 0 : i32
    return %c0_i32, %c0_i32_0, %c0_i32_1 : i32, i32, i32
  }
  func.func @transform_4(%arg0: i32) -> (i32, i32, i32) {
    %c0_i32 = arith.constant 0 : i32
    %c0_i32_0 = arith.constant 0 : i32
    %c0_i32_1 = arith.constant 0 : i32
    %c0_i32_2 = arith.constant 0 : i32
    return %c0_i32, %c0_i32_0, %c0_i32_1 : i32, i32, i32
  }
  func.func @transform_5(%arg0: i32) -> (i32, i32, i32) {
    %c0_i32 = arith.constant 0 : i32
    %c0_i32_0 = arith.constant 0 : i32
    %c0_i32_1 = arith.constant 0 : i32
    %c0_i32_2 = arith.constant 0 : i32
    return %c0_i32, %c0_i32_0, %c0_i32_1 : i32, i32, i32
  }
  func.func @transform_6(%arg0: i32) -> (i32, i32, i32) {
    %c0_i32 = arith.constant 0 : i32
    %c0_i32_0 = arith.constant 0 : i32
    %c0_i32_1 = arith.constant 0 : i32
    %c0_i32_2 = arith.constant 0 : i32
    return %c0_i32, %c0_i32_0, %c0_i32_1 : i32, i32, i32
  }
  func.func @transform_7(%arg0: i32) -> (i32, i32) {
    %c0_i32 = arith.constant 0 : i32
    %c0_i32_0 = arith.constant 0 : i32
    return %arg0, %c0_i32 : i32, i32
  }
}

</mosaic_0001>

<llo_original>
// kernel: tpu_custom_call.1
$region0: #{tpu_custom_call.1}
  #allocation0 [shape = 'u32[]', space=smem, size = 0x4, offset = 0x4, fixed_abs, tag = 'smem constant byte address 0x4 - core index']
  #allocation1 [shape = 'u32[144,128]{1,0:T(1,128)}', space=vmem, size = 0x12000, scoped, tag = 'internal scratch']
  %s0 = inlined_call_operand.hbm [shape: f32[32,128], index: 0, kind: input, shape index: {}]
  %s1 = inlined_call_operand.hbm [shape: bf16[3,256,128], index: 1, kind: input, shape index: {}]
  %s2 = inlined_call_operand.vmem [shape: f32[3,1,128], index: 2, kind: input, shape index: {}]
  %s3 = inlined_call_operand.hbm [shape: bf16[3,256,128], index: 3, kind: input, shape index: {}]
  %s4 = inlined_call_operand.vmem [shape: f32[3,1,128], index: 4, kind: input, shape index: {}]
  %s5 = inlined_call_operand.hbm [shape: bf16[2,128,128], index: 5, kind: input, shape index: {}]
  %s6 = inlined_call_operand.vmem [shape: f32[2,1,128], index: 6, kind: input, shape index: {}]
  %s7 = inlined_call_operand.hbm [shape: f32[32,128], index: 7, kind: output, shape index: {}]
  %s8 = sld [smem:[#allocation0]]
  $region77: #{tpu_custom_call.1} parent=0
    _
  %s10 = ssub.s32 1, %s8
  %s11 = scalar_select 0, %s10, %s8
  $region1: #{tpu_custom_call.1} parent=0
    #allocation2 [shape = 'u8[16384]{0}', space=vmem, size = 0x4000, scoped, tag = 'input window, operand 0']
    #allocation3 [shape = 's32[2]{0}', space=sflag, size = 0x8, scoped, tag = 'scoped memory for tpu_custom_call.1']
    #allocation4 [shape = 's32[2]{0}', space=sflag, size = 0x8, scoped, tag = 'scoped memory for tpu_custom_call.1']
    #allocation5 [shape = 'u8[196608]{0}', space=vmem, size = 0x30000, scoped, tag = 'input window, operand 1, single buffered']
    #allocation6 [shape = 's32[1]{0}', space=sflag, size = 0x4, scoped, tag = 'scoped memory for tpu_custom_call.1']
    #allocation7 [shape = 'u8[196608]{0}', space=vmem, size = 0x30000, scoped, tag = 'input window, operand 3, single buffered']
    #allocation8 [shape = 'u8[65536]{0}', space=vmem, size = 0x10000, scoped, tag = 'input window, operand 5, single buffered']
    #allocation9 [shape = 's32[1]{0}', space=sflag, size = 0x4, scoped, tag = 'scoped memory for tpu_custom_call.1']
    #allocation10 [shape = 'u8[16384]{0}', space=vmem, size = 0x4000, scoped, tag = 'output window, operand 0']
    %12 = vsyncpa [#allocation3], 0
    %s13 = scalar_lea.sflag [#allocation3], 1
    %14 = vsyncpa %s13, 0
    %15 = vsyncpa [#allocation6], 0
    %16 = vsyncpa [#allocation9], 0
    %17 = vsyncpa [#allocation4], 0
    %s18 = scalar_lea.sflag [#allocation4], 1
    %19 = vsyncpa %s18, 0
    loop: start=0, step=1, limit=4
    $region2: #{tpu_custom_call.1} parent=1 // loop_pre_header
      _
    $region3: #{tpu_custom_call.1} parent=1 // loop_header
      %s21 = sphi 0, %s25
      %p22 = scmp.ge.s32.totalorder %s21, 4
      %s31 = sphi 0, %s33
      %s34 = sphi 0, %s31
      %s35 = sphi 0, %s34
      %s51 = sphi 0, %s35
      %s55 = sphi 0, %s55
      %s57 = sphi 0, %s55
      %s58 = sphi 0, %s57
      %s72 = sphi 0, %s58
      %s76 = sphi 0, %s76
      %s78 = sphi 0, %s76
      %s79 = sphi 0, %s78
      %s93 = sphi 0, %s79
      %s97 = sphi 0, %s97
      %s99 = sphi 0, %s97
      %s100 = sphi 0, %s99
      %s114 = sphi 0, %s100
      %s118 = sphi 0, %s118
      %s120 = sphi 0, %s118
      %s121 = sphi 0, %s120
      %s135 = sphi 0, %s121
      %s139 = sphi 0, %s139
      %s141 = sphi 0, %s139
      %s142 = sphi 0, %s141
      %s156 = sphi 0, %s142
      %s160 = sphi 0, %s160
      %s162 = sphi 0, %s160
      %s163 = sphi 0, %s162
      %s177 = sphi 0, %s163
      %s183 = sphi 0, %s185
      %s186 = sphi 0, %s183
      %s187 = sphi 0, %s186
      %s203 = sphi 0, %s187
    $region4: #{tpu_custom_call.1} parent=1 // loop_header_branch
      %24 = sbr.rel (%p22) target = $region8
    $region5: #{tpu_custom_call.1} parent=1 // loop_body
      %s26 = ssub.s32 %s21, 1
      %s27 = ssub.s32 %s21, 2
      %s28 = sadd.s32 %s21, 1
      %s29 = ssub.s32 %s21, %s28
      %p30 = scmp.eq.s32.totalorder %s29, 0
      %s32 = sadd.s32 %s31, 1
      %s33 = scalar_select %p30, %s31, %s32
      %p36 = pneg %p30
      %p37 = scmp.eq.s32.totalorder %s21, 1
      %p38 = por %p36, %p37
      %p39 = scmp.ne.s32.totalorder %s31, %s34
      %p40 = scmp.eq.s32.totalorder %s21, 0
      %p41 = por %p39, %p40
      %p42 = scmp.ne.s32.totalorder %s31, %s34
      %p43 = scmp.eq.s32.totalorder %s26, 1
      %p44 = por %p42, %p43
      %p45 = scmp.ne.s32.totalorder %s34, %s35
      %p46 = scmp.eq.s32.totalorder %s26, 0
      %p47 = por %p45, %p46
      %p48 = scmp.ne.s32.totalorder %s34, %s35
      %p49 = scmp.eq.s32.totalorder %s27, 1
      %p50 = por %p48, %p49
      %p52 = scmp.ne.s32.totalorder %s35, %s51
      %p53 = scmp.eq.s32.totalorder %s27, 0
      %p54 = por %p52, %p53
      %s56 = sadd.s32 %s55, 1
      %p59 = scmp.eq.s32.totalorder %s21, 1
      %p60 = scmp.ne.s32.totalorder %s55, %s57
      %p61 = scmp.eq.s32.totalorder %s21, 0
      %p62 = por %p60, %p61
      %p63 = scmp.ne.s32.totalorder %s55, %s57
      %p64 = scmp.eq.s32.totalorder %s26, 1
      %p65 = por %p63, %p64
      %p66 = scmp.ne.s32.totalorder %s57, %s58
      %p67 = scmp.eq.s32.totalorder %s26, 0
      %p68 = por %p66, %p67
      %p69 = scmp.ne.s32.totalorder %s57, %s58
      %p70 = scmp.eq.s32.totalorder %s27, 1
      %p71 = por %p69, %p70
      %p73 = scmp.ne.s32.totalorder %s58, %s72
      %p74 = scmp.eq.s32.totalorder %s27, 0
      %p75 = por %p73, %p74
      %s77 = sadd.s32 %s76, 1
      %p80 = scmp.eq.s32.totalorder %s21, 1
      %p81 = scmp.ne.s32.totalorder %s76, %s78
      %p82 = scmp.eq.s32.totalorder %s21, 0
      %p83 = por %p81, %p82
      %p84 = scmp.ne.s32.totalorder %s76, %s78
      %p85 = scmp.eq.s32.totalorder %s26, 1
      %p86 = por %p84, %p85
      %p87 = scmp.ne.s32.totalorder %s78, %s79
      %p88 = scmp.eq.s32.totalorder %s26, 0
      %p89 = por %p87, %p88
      %p90 = scmp.ne.s32.totalorder %s78, %s79
      %p91 = scmp.eq.s32.totalorder %s27, 1
      %p92 = por %p90, %p91
      %p94 = scmp.ne.s32.totalorder %s79, %s93
      %p95 = scmp.eq.s32.totalorder %s27, 0
      %p96 = por %p94, %p95
      %s98 = sadd.s32 %s97, 1
      %p101 = scmp.eq.s32.totalorder %s21, 1
      %p102 = scmp.ne.s32.totalorder %s97, %s99
      %p103 = scmp.eq.s32.totalorder %s21, 0
      %p104 = por %p102, %p103
      %p105 = scmp.ne.s32.totalorder %s97, %s99
      %p106 = scmp.eq.s32.totalorder %s26, 1
      %p107 = por %p105, %p106
      %p108 = scmp.ne.s32.totalorder %s99, %s100
      %p109 = scmp.eq.s32.totalorder %s26, 0
      %p110 = por %p108, %p109
      %p111 = scmp.ne.s32.totalorder %s99, %s100
      %p112 = scmp.eq.s32.totalorder %s27, 1
      %p113 = por %p111, %p112
      %p115 = scmp.ne.s32.totalorder %s100, %s114
      %p116 = scmp.eq.s32.totalorder %s27, 0
      %p117 = por %p115, %p116
      %s119 = sadd.s32 %s118, 1
      %p122 = scmp.eq.s32.totalorder %s21, 1
      %p123 = scmp.ne.s32.totalorder %s118, %s120
      %p124 = scmp.eq.s32.totalorder %s21, 0
      %p125 = por %p123, %p124
      %p126 = scmp.ne.s32.totalorder %s118, %s120
      %p127 = scmp.eq.s32.totalorder %s26, 1
      %p128 = por %p126, %p127
      %p129 = scmp.ne.s32.totalorder %s120, %s121
      %p130 = scmp.eq.s32.totalorder %s26, 0
      %p131 = por %p129, %p130
      %p132 = scmp.ne.s32.totalorder %s120, %s121
      %p133 = scmp.eq.s32.totalorder %s27, 1
      %p134 = por %p132, %p133
      %p136 = scmp.ne.s32.totalorder %s121, %s135
      %p137 = scmp.eq.s32.totalorder %s27, 0
      %p138 = por %p136, %p137
      %s140 = sadd.s32 %s139, 1
      %p143 = scmp.eq.s32.totalorder %s21, 1
      %p144 = scmp.ne.s32.totalorder %s139, %s141
      %p145 = scmp.eq.s32.totalorder %s21, 0
      %p146 = por %p144, %p145
      %p147 = scmp.ne.s32.totalorder %s139, %s141
      %p148 = scmp.eq.s32.totalorder %s26, 1
      %p149 = por %p147, %p148
      %p150 = scmp.ne.s32.totalorder %s141, %s142
      %p151 = scmp.eq.s32.totalorder %s26, 0
      %p152 = por %p150, %p151
      %p153 = scmp.ne.s32.totalorder %s141, %s142
      %p154 = scmp.eq.s32.totalorder %s27, 1
      %p155 = por %p153, %p154
      %p157 = scmp.ne.s32.totalorder %s142, %s156
      %p158 = scmp.eq.s32.totalorder %s27, 0
      %p159 = por %p157, %p158
      %s161 = sadd.s32 %s160, 1
      %p164 = scmp.eq.s32.totalorder %s21, 1
      %p165 = scmp.ne.s32.totalorder %s160, %s162
      %p166 = scmp.eq.s32.totalorder %s21, 0
      %p167 = por %p165, %p166
      %p168 = scmp.ne.s32.totalorder %s160, %s162
      %p169 = scmp.eq.s32.totalorder %s26, 1
      %p170 = por %p168, %p169
      %p171 = scmp.ne.s32.totalorder %s162, %s163
      %p172 = scmp.eq.s32.totalorder %s26, 0
      %p173 = por %p171, %p172
      %p174 = scmp.ne.s32.totalorder %s162, %s163
      %p175 = scmp.eq.s32.totalorder %s27, 1
      %p176 = por %p174, %p175
      %p178 = scmp.ne.s32.totalorder %s163, %s177
      %p179 = scmp.eq.s32.totalorder %s27, 0
      %p180 = por %p178, %p179
      %s181 = ssub.s32 %s21, %s28
      %p182 = scmp.eq.s32.totalorder %s181, 0
      %s184 = sadd.s32 %s183, 1
      %s185 = scalar_select %p182, %s183, %s184
      %p188 = pneg %p182
      %p189 = scmp.eq.s32.totalorder %s21, 1
      %p190 = por %p188, %p189
      %p191 = scmp.ne.s32.totalorder %s183, %s186
      %p192 = scmp.eq.s32.totalorder %s21, 0
      %p193 = por %p191, %p192
      %p194 = scmp.ne.s32.totalorder %s183, %s186
      %p195 = scmp.eq.s32.totalorder %s26, 1
      %p196 = por %p194, %p195
      %p197 = scmp.ne.s32.totalorder %s186, %s187
      %p198 = scmp.eq.s32.totalorder %s26, 0
      %p199 = por %p197, %p198
      %p200 = scmp.ne.s32.totalorder %s186, %s187
      %p201 = scmp.eq.s32.totalorder %s27, 1
      %p202 = por %p200, %p201
      %p204 = scmp.ne.s32.totalorder %s187, %s203
      %p205 = scmp.eq.s32.totalorder %s27, 0
      %p206 = por %p204, %p205
      %p207 = scmp.le.s32.totalorder 1, %s21
      %p208 = scmp.lt.s32.totalorder %s21, 3
      %p209 = pnand %p207, %p208
      %p210 = pneg %p209
      // Predicated region
      $region9: #{tpu_custom_call.1} parent=5 // pred_check
        _
      $region10: #{tpu_custom_call.1} parent=5 // pred_check_branch
        %212 = sbr.rel (%p209) target = $region12
      $region11: #{tpu_custom_call.1} parent=5 // pred_region
        %s213 = ssub.s32 %s21, 1
        // Predicated region
        $region13: #{tpu_custom_call.1} parent=11 // pred_check
          %p214 = pneg %p68
        $region14: #{tpu_custom_call.1} parent=11 // pred_check_branch
          %216 = sbr.rel (%p214) target = $region16
        $region15: #{tpu_custom_call.1} parent=11 // pred_region
          %s218 = ssub.s32 6144, 6144
          %219 = vsyncadd [#allocation6], %s218
          %s220 = sshll.u32 [#allocation5], 4
          %s221 = int_to_ptr.vmem [resolvable:$true] %s220
          %226 = dma.hbm_to_vmem [thread:$0]  %s1, 6144, %s221, [#allocation6], 64, 64, 4
        $region16: #{tpu_custom_call.1} parent=11 // pred_fallthru
          _
        // Predicated region
        $region17: #{tpu_custom_call.1} parent=11 // pred_check
          %p227 = pneg %p89
        $region18: #{tpu_custom_call.1} parent=11 // pred_check_branch
          %229 = sbr.rel (%p227) target = $region20
        $region19: #{tpu_custom_call.1} parent=11 // pred_region
          _
        $region20: #{tpu_custom_call.1} parent=11 // pred_fallthru
          _
        // Predicated region
        $region21: #{tpu_custom_call.1} parent=11 // pred_check
          %p230 = pneg %p110
        $region22: #{tpu_custom_call.1} parent=11 // pred_check_branch
          %232 = sbr.rel (%p230) target = $region24
        $region23: #{tpu_custom_call.1} parent=11 // pred_region
          %s234 = ssub.s32 6144, 6144
          %235 = vsyncadd [#allocation6], %s234
          %s236 = sshll.u32 [#allocation7], 4
          %s237 = int_to_ptr.vmem [resolvable:$true] %s236
          %242 = dma.hbm_to_vmem [thread:$0]  %s3, 6144, %s237, [#allocation6], 64, 64, 4
        $region24: #{tpu_custom_call.1} parent=11 // pred_fallthru
          _
        // Predicated region
        $region25: #{tpu_custom_call.1} parent=11 // pred_check
          %p243 = pneg %p131
        $region26: #{tpu_custom_call.1} parent=11 // pred_check_branch
          %245 = sbr.rel (%p243) target = $region28
        $region27: #{tpu_custom_call.1} parent=11 // pred_region
          _
        $region28: #{tpu_custom_call.1} parent=11 // pred_fallthru
          _
        // Predicated region
        $region29: #{tpu_custom_call.1} parent=11 // pred_check
          %p246 = pneg %p152
        $region30: #{tpu_custom_call.1} parent=11 // pred_check_branch
          %248 = sbr.rel (%p246) target = $region32
        $region31: #{tpu_custom_call.1} parent=11 // pred_region
          %s250 = ssub.s32 2048, 2048
          %251 = vsyncadd [#allocation9], %s250
          %s252 = sshll.u32 [#allocation8], 4
          %s253 = int_to_ptr.vmem [resolvable:$true] %s252
          %258 = dma.hbm_to_vmem [thread:$0]  %s5, 2048, %s253, [#allocation9], 64, 64, 4
        $region32: #{tpu_custom_call.1} parent=11 // pred_fallthru
          _
        // Predicated region
        $region33: #{tpu_custom_call.1} parent=11 // pred_check
          %p259 = pneg %p173
        $region34: #{tpu_custom_call.1} parent=11 // pred_check_branch
          %261 = sbr.rel (%p259) target = $region36
        $region35: #{tpu_custom_call.1} parent=11 // pred_region
          _
        $region36: #{tpu_custom_call.1} parent=11 // pred_fallthru
          _
      $region12: #{tpu_custom_call.1} parent=5 // pred_fallthru
        _
      %p262 = scmp.lt.s32.totalorder %s21, 2
      // Predicated region
      $region37: #{tpu_custom_call.1} parent=5 // pred_check
        %p263 = pneg %p262
      $region38: #{tpu_custom_call.1} parent=5 // pred_check_branch
        %265 = sbr.rel (%p263) target = $region40
      $region39: #{tpu_custom_call.1} parent=5 // pred_region
        // Predicated region
        $region41: #{tpu_custom_call.1} parent=39 // pred_check
          %p266 = pneg %p41
        $region42: #{tpu_custom_call.1} parent=39 // pred_check_branch
          %268 = sbr.rel (%p266) target = $region44
        $region43: #{tpu_custom_call.1} parent=39 // pred_region
          %s269 = sand.u32 %s31, 1
          %s270 = scalar_lea.sflag [#allocation3], %s269
          %s271 = sand.u32 %s31, 1
          %s272 = smul.addr %s271, 16
          %s273 = scalar_lea.vmem [#allocation2], %s272
          %s274 = smul.u32 2, %s21
          %s276 = ssub.s32 256, 256
          %277 = vsyncadd %s270, %s276
          %s278 = smul.addr %s274, 128
          %s279 = scalar_lea.hbm %s0, %s278
          %s280 = sshll.u32 %s273, 4
          %s281 = int_to_ptr.vmem [resolvable:$true] %s280
          %286 = dma.hbm_to_vmem [thread:$0]  %s279, 256, %s281, %s270, 128, 128, 8
        $region44: #{tpu_custom_call.1} parent=39 // pred_fallthru
          _
      $region40: #{tpu_custom_call.1} parent=5 // pred_fallthru
        _
      %p287 = scmp.le.s32.totalorder 1, %s21
      %p288 = scmp.lt.s32.totalorder %s21, 3
      %p289 = pnand %p287, %p288
      %p290 = pneg %p289
      // Predicated region
      $region45: #{tpu_custom_call.1} parent=5 // pred_check
        _
      $region46: #{tpu_custom_call.1} parent=5 // pred_check_branch
        %292 = sbr.rel (%p289) target = $region48
      $region47: #{tpu_custom_call.1} parent=5 // pred_region
        %s293 = ssub.s32 %s21, 1
        %s294 = sand.u32 %s34, 1
        %s295 = scalar_lea.sflag [#allocation3], %s294
        %s296 = sand.u32 %s34, 1
        %s297 = smul.addr %s296, 16
        %s298 = scalar_lea.vmem [#allocation2], %s297
        // Predicated region
        $region49: #{tpu_custom_call.1} parent=47 // pred_check
          %p299 = pneg %p47
        $region50: #{tpu_custom_call.1} parent=47 // pred_check_branch
          %301 = sbr.rel (%p299) target = $region52
        $region51: #{tpu_custom_call.1} parent=47 // pred_region
          %302 = dma.done %s295, 256
        $region52: #{tpu_custom_call.1} parent=47 // pred_fallthru
          _
        // Predicated region
        $region53: #{tpu_custom_call.1} parent=47 // pred_check
          %p303 = pneg %p68
        $region54: #{tpu_custom_call.1} parent=47 // pred_check_branch
          %305 = sbr.rel (%p303) target = $region56
        $region55: #{tpu_custom_call.1} parent=47 // pred_region
          %306 = dma.done [#allocation6], 6144
        $region56: #{tpu_custom_call.1} parent=47 // pred_fallthru
          _
        // Predicated region
        $region57: #{tpu_custom_call.1} parent=47 // pred_check
          %p307 = pneg %p110
        $region58: #{tpu_custom_call.1} parent=47 // pred_check_branch
          %309 = sbr.rel (%p307) target = $region60
        $region59: #{tpu_custom_call.1} parent=47 // pred_region
          %310 = dma.done [#allocation6], 6144
        $region60: #{tpu_custom_call.1} parent=47 // pred_fallthru
          _
        // Predicated region
        $region61: #{tpu_custom_call.1} parent=47 // pred_check
          %p311 = pneg %p152
        $region62: #{tpu_custom_call.1} parent=47 // pred_check_branch
          %313 = sbr.rel (%p311) target = $region64
        $region63: #{tpu_custom_call.1} parent=47 // pred_region
          %314 = dma.done [#allocation9], 2048
        $region64: #{tpu_custom_call.1} parent=47 // pred_fallthru
          _
        %s315 = sand.u32 %s34, 1
        %s316 = scalar_lea.sflag [#allocation3], %s315
        %s317 = sand.u32 %s34, 1
        %s318 = smul.addr %s317, 16
        %s319 = scalar_lea.vmem [#allocation2], %s318
        %p320 = pneg %p47
        %p321 = pneg %p44
        %p322 = pneg %p68
        %p323 = pneg %p65
        %p324 = pneg %p89
        %p325 = pneg %p86
        %p326 = pneg %p110
        %p327 = pneg %p107
        %p328 = pneg %p131
        %p329 = pneg %p128
        %p330 = pneg %p152
        %p331 = pneg %p149
        %p332 = pneg %p173
        %p333 = pneg %p170
        %p334 = pneg %p199
        %p335 = pneg %p196
        %s336 = sand.u32 %s186, 1
        %s337 = scalar_lea.sflag [#allocation4], %s336
        %s338 = sand.u32 %s186, 1
        %s339 = smul.addr %s338, 16
        %s340 = scalar_lea.vmem [#allocation10], %s339
        %s341 = smul.u32 2, %s26
        %s342 = smul.u32 2, %s26
        %v344 = vlaneseq
        %v345 = vshrl.u32 %v344, 7
        %v346 = vadd.s32 %v345, 8
        %vm347 = vcmp.lt.s32.totalorder %v345, 0
        %v348 = vsub.s32 0, %v345
        %v349 = vsel %vm347, %v348, %v345
        %v350 = vshrl.u32 %v349, 4
        %v351 = vand.u32 %v349, 15
        %v352 = vsub.s32 0, %v351
        %v353 = vsel %vm347, %v352, %v351
        %vm354 = vcmp.lt.s32.totalorder %v346, 0
        %v355 = vsub.s32 0, %v346
        %v356 = vsel %vm354, %v355, %v346
        %v357 = vshrl.u32 %v356, 4
        %v358 = vand.u32 %v356, 15
        %v359 = vsub.s32 0, %v358
        %v360 = vsel %vm354, %v359, %v358
        %vm361 = vcmp.ne.s32.totalorder %v353, 0
        %vm362 = vcmp.ne.s32.totalorder %v360, 0
        %vm363 = vcmp.lt.s32.totalorder %v353, 0
        %vm364 = vcmp.lt.s32.totalorder %v360, 0
        %vm365 = vmand %vm363, %vm361
        %vm366 = vmand %vm364, %vm362
        %v367 = vadd.s32 %v353, 16
        %v368 = vadd.s32 %v360, 16
        %v369 = vsel %vm365, %v367, %v353
        %v370 = vsel %vm366, %v368, %v360
        %vm371 = vcmp.ge.s32.totalorder %v369, 1
        %vm372 = vcmp.ge.s32.totalorder %v370, 1
        %vm373 = vcmp.ge.s32.totalorder %v369, 2
        %vm374 = vcmp.ge.s32.totalorder %v370, 2
        %vm375 = vcmp.ge.s32.totalorder %v369, 4
        %vm376 = vcmp.ge.s32.totalorder %v370, 4
        %v377 = vld [vmem:[%s298] sm:$0xff]
        %v378 = vld [vmem:[%s298 + $0x8] sm:$0xff]
        %v379 = vrot.slane %v377, 7
        %v380 = vrot.slane %v378, 7
        %vm381 = vcmp.lt.s32.totalorder %v345, 1
        %v382 = vsel %vm381, %v379, %v380
        %v383 = vsel %vm381, %v380, %v379
        %v384 = vsel %vm371, 1, 0
        %v385 = vsel %vm372, 1, 0
        %vm386 = vcmp.eq.s32.totalorder %v384, 1
        %vm387 = vcmp.eq.s32.totalorder %v385, 1
        %v388 = vsel %vm386, %v383, 0.0
        %v389 = vsel %vm387, %v382, 0.0
        %v390 = vpack.c.bf16 %v389, %v388
        %v391 = vpack.c.bf16 %v378, %v377
        %v392 = vld [vmem:[#allocation5] sm:$0xf]
        %v393 = vld [vmem:[#allocation5 + $0x4] sm:$0xf]
        %v394 = vld [vmem:[#allocation5 + $0x8] sm:$0xf]
        %v395 = vld [vmem:[#allocation5 + $0xc] sm:$0xf]
        %v396 = vld [vmem:[#allocation5 + $0x10] sm:$0xf]
        %v397 = vld [vmem:[#allocation5 + $0x14] sm:$0xf]
        %v398 = vld [vmem:[#allocation5 + $0x18] sm:$0xf]
        %v399 = vld [vmem:[#allocation5 + $0x1c] sm:$0xf]
        %v400 = vld [vmem:[#allocation5 + $0x20] sm:$0xf]
        %v401 = vld [vmem:[#allocation5 + $0x24] sm:$0xf]
        %v402 = vld [vmem:[#allocation5 + $0x28] sm:$0xf]
        %v403 = vld [vmem:[#allocation5 + $0x2c] sm:$0xf]
        %v404 = vld [vmem:[#allocation5 + $0x30] sm:$0xf]
        %v405 = vld [vmem:[#allocation5 + $0x34] sm:$0xf]
        %v406 = vld [vmem:[#allocation5 + $0x38] sm:$0xf]
        %v407 = vld [vmem:[#allocation5 + $0x3c] sm:$0xf]
        %v408 = vld [vmem:[#allocation5 + $0x40] sm:$0xf]
        %v409 = vld [vmem:[#allocation5 + $0x44] sm:$0xf]
        %v410 = vld [vmem:[#allocation5 + $0x48] sm:$0xf]
        %v411 = vld [vmem:[#allocation5 + $0x4c] sm:$0xf]
        %v412 = vld [vmem:[#allocation5 + $0x50] sm:$0xf]
        %v413 = vld [vmem:[#allocation5 + $0x54] sm:$0xf]
        %v414 = vld [vmem:[#allocation5 + $0x58] sm:$0xf]
        %v415 = vld [vmem:[#allocation5 + $0x5c] sm:$0xf]
        %v416 = vld [vmem:[#allocation5 + $0x60] sm:$0xf]
        %v417 = vld [vmem:[#allocation5 + $0x64] sm:$0xf]
        %v418 = vld [vmem:[#allocation5 + $0x68] sm:$0xf]
        %v419 = vld [vmem:[#allocation5 + $0x6c] sm:$0xf]
        %v420 = vld [vmem:[#allocation5 + $0x70] sm:$0xf]
        %v421 = vld [vmem:[#allocation5 + $0x74] sm:$0xf]
        %v422 = vld [vmem:[#allocation5 + $0x78] sm:$0xf]
        %v423 = vld [vmem:[#allocation5 + $0x7c] sm:$0xf]
        %v424 = vld [vmem:[%s2] sm:$0x1]
        %v426 = vlaneseq
        %v427 = vshrl.u32 %v426, 7
        %v428 = vsub.s32 0, %v427
        %v429 = vrot.slane %v424, %v428
        %v463 = vunpack.c.l.b16 %v392
        %v464 = vunpack.c.l.b16 %v393
        %v465 = vunpack.c.l.b16 %v394
        %v466 = vunpack.c.l.b16 %v395
        %v467 = vunpack.c.l.b16 %v396
        %v468 = vunpack.c.l.b16 %v397
        %v469 = vunpack.c.l.b16 %v398
        %v470 = vunpack.c.l.b16 %v399
        %v471 = vunpack.c.l.b16 %v400
        %v472 = vunpack.c.l.b16 %v401
        %v473 = vunpack.c.l.b16 %v402
        %v474 = vunpack.c.l.b16 %v403
        %v475 = vunpack.c.l.b16 %v404
        %v476 = vunpack.c.l.b16 %v405
        %v477 = vunpack.c.l.b16 %v406
        %v478 = vunpack.c.l.b16 %v407
        %v479 = vunpack.c.l.b16 %v408
        %v480 = vunpack.c.l.b16 %v409
        %v481 = vunpack.c.l.b16 %v410
        %v482 = vunpack.c.l.b16 %v411
        %v483 = vunpack.c.l.b16 %v412
        %v484 = vunpack.c.l.b16 %v413
        %v485 = vunpack.c.l.b16 %v414
        %v486 = vunpack.c.l.b16 %v415
        %v487 = vunpack.c.l.b16 %v416
        %v488 = vunpack.c.l.b16 %v417
        %v489 = vunpack.c.l.b16 %v418
        %v490 = vunpack.c.l.b16 %v419
        %v491 = vunpack.c.l.b16 %v420
        %v492 = vunpack.c.l.b16 %v421
        %v493 = vunpack.c.l.b16 %v422
        %v494 = vunpack.c.l.b16 %v423
        %v495 = vpack.c.b16 %v464, %v463
        %v496 = vpack.c.b16 %v466, %v465
        %v497 = vpack.c.b16 %v468, %v467
        %v498 = vpack.c.b16 %v470, %v469
        %v499 = vpack.c.b16 %v472, %v471
        %v500 = vpack.c.b16 %v474, %v473
        %v501 = vpack.c.b16 %v476, %v475
        %v502 = vpack.c.b16 %v478, %v477
        %v503 = vpack.c.b16 %v480, %v479
        %v504 = vpack.c.b16 %v482, %v481
        %v505 = vpack.c.b16 %v484, %v483
        %v506 = vpack.c.b16 %v486, %v485
        %v507 = vpack.c.b16 %v488, %v487
        %v508 = vpack.c.b16 %v490, %v489
        %v509 = vpack.c.b16 %v492, %v491
        %v510 = vpack.c.b16 %v494, %v493
        %527 = vmatprep.subr.bf16.mxu0 0
        %528 = vmatpush1.bf16.msra.mxu0 %v495
        %529 = vmatprep.subr.bf16.mxu0 0
        %530 = vmatpush1.bf16.msra.mxu0 %v496
        %531 = vmatprep.subr.bf16.mxu0 0
        %532 = vmatpush1.bf16.msra.mxu0 %v497
        %533 = vmatprep.subr.bf16.mxu0 0
        %534 = vmatpush1.bf16.msra.mxu0 %v498
        %535 = vmatprep.subr.bf16.mxu0 0
        %536 = vmatpush1.bf16.msra.mxu0 %v499
        %537 = vmatprep.subr.bf16.mxu0 0
        %538 = vmatpush1.bf16.msra.mxu0 %v500
        %539 = vmatprep.subr.bf16.mxu0 0
        %540 = vmatpush1.bf16.msra.mxu0 %v501
        %541 = vmatprep.subr.bf16.mxu0 0
        %542 = vmatpush1.bf16.msra.mxu0 %v502
        %543 = vmatprep.subr.bf16.mxu0 0
        %544 = vmatpush1.bf16.msra.mxu0 %v503
        %545 = vmatprep.subr.bf16.mxu0 0
        %546 = vmatpush1.bf16.msra.mxu0 %v504
        %547 = vmatprep.subr.bf16.mxu0 0
        %548 = vmatpush1.bf16.msra.mxu0 %v505
        %549 = vmatprep.subr.bf16.mxu0 0
        %550 = vmatpush1.bf16.msra.mxu0 %v506
        %551 = vmatprep.subr.bf16.mxu0 0
        %552 = vmatpush1.bf16.msra.mxu0 %v507
        %553 = vmatprep.subr.bf16.mxu0 0
        %554 = vmatpush1.bf16.msra.mxu0 %v508
        %555 = vmatprep.subr.bf16.mxu0 0
        %556 = vmatpush1.bf16.msra.mxu0 %v509
        %557 = vmatprep.subr.bf16.mxu0 0
        %558 = vmatpush1.bf16.msra.mxu0 %v510
        %559 = vmatprep.mubr.bf16.mxu0 %v391
        %560 = vmatmul.mubr.bf16.gmra.mrb[0].mxu0 %v390
        %v561 = vpop.f32.mrb[0].mxu0
        %v562 = vadd.f32 %v429, %v561
        %v563 = vpop.f32.mrb[0].mxu0
        %v564 = vpop.f32.mrb[0].mxu0
        %v565 = vadd.f32 %v429, %v564
        %v566 = vpop.f32.mrb[0].mxu0
        %567 = vdwg.mxu0
        %v568 = vmax.f32 %v562, 0.0
        %v569 = vmax.f32 %v565, 0.0
        %v570 = vrot.slane %v568, 7
        %v571 = vrot.slane %v569, 7
        %v572 = vsel %vm381, %v570, %v571
        %v573 = vsel %vm381, %v571, %v570
        %v574 = vsel %vm386, %v573, 0.0
        %v575 = vsel %vm387, %v572, 0.0
        %v576 = vpack.c.bf16 %v575, %v574
        %v577 = vpack.c.bf16 %v569, %v568
        %v578 = vld [vmem:[#allocation7] sm:$0xf]
        %v579 = vld [vmem:[#allocation7 + $0x4] sm:$0xf]
        %v580 = vld [vmem:[#allocation7 + $0x8] sm:$0xf]
        %v581 = vld [vmem:[#allocation7 + $0xc] sm:$0xf]
        %v582 = vld [vmem:[#allocation7 + $0x10] sm:$0xf]
        %v583 = vld [vmem:[#allocation7 + $0x14] sm:$0xf]
        %v584 = vld [vmem:[#allocation7 + $0x18] sm:$0xf]
        %v585 = vld [vmem:[#allocation7 + $0x1c] sm:$0xf]
        %v586 = vld [vmem:[#allocation7 + $0x20] sm:$0xf]
        %v587 = vld [vmem:[#allocation7 + $0x24] sm:$0xf]
        %v588 = vld [vmem:[#allocation7 + $0x28] sm:$0xf]
        %v589 = vld [vmem:[#allocation7 + $0x2c] sm:$0xf]
        %v590 = vld [vmem:[#allocation7 + $0x30] sm:$0xf]
        %v591 = vld [vmem:[#allocation7 + $0x34] sm:$0xf]
        %v592 = vld [vmem:[#allocation7 + $0x38] sm:$0xf]
        %v593 = vld [vmem:[#allocation7 + $0x3c] sm:$0xf]
        %v594 = vld [vmem:[#allocation7 + $0x40] sm:$0xf]
        %v595 = vld [vmem:[#allocation7 + $0x44] sm:$0xf]
        %v596 = vld [vmem:[#allocation7 + $0x48] sm:$0xf]
        %v597 = vld [vmem:[#allocation7 + $0x4c] sm:$0xf]
        %v598 = vld [vmem:[#allocation7 + $0x50] sm:$0xf]
        %v599 = vld [vmem:[#allocation7 + $0x54] sm:$0xf]
        %v600 = vld [vmem:[#allocation7 + $0x58] sm:$0xf]
        %v601 = vld [vmem:[#allocation7 + $0x5c] sm:$0xf]
        %v602 = vld [vmem:[#allocation7 + $0x60] sm:$0xf]
        %v603 = vld [vmem:[#allocation7 + $0x64] sm:$0xf]
        %v604 = vld [vmem:[#allocation7 + $0x68] sm:$0xf]
        %v605 = vld [vmem:[#allocation7 + $0x6c] sm:$0xf]
        %v606 = vld [vmem:[#allocation7 + $0x70] sm:$0xf]
        %v607 = vld [vmem:[#allocation7 + $0x74] sm:$0xf]
        %v608 = vld [vmem:[#allocation7 + $0x78] sm:$0xf]
        %v609 = vld [vmem:[#allocation7 + $0x7c] sm:$0xf]
        %v610 = vld [vmem:[%s4] sm:$0x1]
        %v612 = vlaneseq
        %v613 = vshrl.u32 %v612, 7
        %v614 = vsub.s32 0, %v613
        %v615 = vrot.slane %v610, %v614
        %v649 = vunpack.c.l.b16 %v578
        %v650 = vunpack.c.l.b16 %v579
        %v651 = vunpack.c.l.b16 %v580
        %v652 = vunpack.c.l.b16 %v581
        %v653 = vunpack.c.l.b16 %v582
        %v654 = vunpack.c.l.b16 %v583
        %v655 = vunpack.c.l.b16 %v584
        %v656 = vunpack.c.l.b16 %v585
        %v657 = vunpack.c.l.b16 %v586
        %v658 = vunpack.c.l.b16 %v587
        %v659 = vunpack.c.l.b16 %v588
        %v660 = vunpack.c.l.b16 %v589
        %v661 = vunpack.c.l.b16 %v590
        %v662 = vunpack.c.l.b16 %v591
        %v663 = vunpack.c.l.b16 %v592
        %v664 = vunpack.c.l.b16 %v593
        %v665 = vunpack.c.l.b16 %v594
        %v666 = vunpack.c.l.b16 %v595
        %v667 = vunpack.c.l.b16 %v596
        %v668 = vunpack.c.l.b16 %v597
        %v669 = vunpack.c.l.b16 %v598
        %v670 = vunpack.c.l.b16 %v599
        %v671 = vunpack.c.l.b16 %v600
        %v672 = vunpack.c.l.b16 %v601
        %v673 = vunpack.c.l.b16 %v602
        %v674 = vunpack.c.l.b16 %v603
        %v675 = vunpack.c.l.b16 %v604
        %v676 = vunpack.c.l.b16 %v605
        %v677 = vunpack.c.l.b16 %v606
        %v678 = vunpack.c.l.b16 %v607
        %v679 = vunpack.c.l.b16 %v608
        %v680 = vunpack.c.l.b16 %v609
        %v681 = vpack.c.b16 %v650, %v649
        %v682 = vpack.c.b16 %v652, %v651
        %v683 = vpack.c.b16 %v654, %v653
        %v684 = vpack.c.b16 %v656, %v655
        %v685 = vpack.c.b16 %v658, %v657
        %v686 = vpack.c.b16 %v660, %v659
        %v687 = vpack.c.b16 %v662, %v661
        %v688 = vpack.c.b16 %v664, %v663
        %v689 = vpack.c.b16 %v666, %v665
        %v690 = vpack.c.b16 %v668, %v667
        %v691 = vpack.c.b16 %v670, %v669
        %v692 = vpack.c.b16 %v672, %v671
        %v693 = vpack.c.b16 %v674, %v673
        %v694 = vpack.c.b16 %v676, %v675
        %v695 = vpack.c.b16 %v678, %v677
        %v696 = vpack.c.b16 %v680, %v679
        %713 = vmatprep.subr.bf16.mxu0 0
        %714 = vmatpush1.bf16.msra.mxu0 %v681
        %715 = vmatprep.subr.bf16.mxu0 0
        %716 = vmatpush1.bf16.msra.mxu0 %v682
        %717 = vmatprep.subr.bf16.mxu0 0
        %718 = vmatpush1.bf16.msra.mxu0 %v683
        %719 = vmatprep.subr.bf16.mxu0 0
        %720 = vmatpush1.bf16.msra.mxu0 %v684
        %721 = vmatprep.subr.bf16.mxu0 0
        %722 = vmatpush1.bf16.msra.mxu0 %v685
        %723 = vmatprep.subr.bf16.mxu0 0
        %724 = vmatpush1.bf16.msra.mxu0 %v686
        %725 = vmatprep.subr.bf16.mxu0 0
        %726 = vmatpush1.bf16.msra.mxu0 %v687
        %727 = vmatprep.subr.bf16.mxu0 0
        %728 = vmatpush1.bf16.msra.mxu0 %v688
        %729 = vmatprep.subr.bf16.mxu0 0
        %730 = vmatpush1.bf16.msra.mxu0 %v689
        %731 = vmatprep.subr.bf16.mxu0 0
        %732 = vmatpush1.bf16.msra.mxu0 %v690
        %733 = vmatprep.subr.bf16.mxu0 0
        %734 = vmatpush1.bf16.msra.mxu0 %v691
        %735 = vmatprep.subr.bf16.mxu0 0
        %736 = vmatpush1.bf16.msra.mxu0 %v692
        %737 = vmatprep.subr.bf16.mxu0 0
        %738 = vmatpush1.bf16.msra.mxu0 %v693
        %739 = vmatprep.subr.bf16.mxu0 0
        %740 = vmatpush1.bf16.msra.mxu0 %v694
        %741 = vmatprep.subr.bf16.mxu0 0
        %742 = vmatpush1.bf16.msra.mxu0 %v695
        %743 = vmatprep.subr.bf16.mxu0 0
        %744 = vmatpush1.bf16.msra.mxu0 %v696
        %745 = vmatprep.mubr.bf16.mxu0 %v577
        %746 = vmatmul.mubr.bf16.gmra.mrb[0].mxu0 %v576
        %v747 = vpop.f32.mrb[0].mxu0
        %v748 = vadd.f32 %v615, %v747
        %v749 = vpop.f32.mrb[0].mxu0
        %v750 = vpop.f32.mrb[0].mxu0
        %v751 = vadd.f32 %v615, %v750
        %v752 = vpop.f32.mrb[0].mxu0
        %753 = vdwg.mxu0
        %v754 = vmax.f32 %v748, 0.0
        %v755 = vmax.f32 %v751, 0.0
        %v756 = vld [vmem:[#allocation8] sm:$0xf]
        %v757 = vld [vmem:[#allocation8 + $0x4] sm:$0xf]
        %v758 = vld [vmem:[#allocation8 + $0x8] sm:$0xf]
        %v759 = vld [vmem:[#allocation8 + $0xc] sm:$0xf]
        %v760 = vld [vmem:[#allocation8 + $0x10] sm:$0xf]
        %v761 = vld [vmem:[#allocation8 + $0x14] sm:$0xf]
        %v762 = vld [vmem:[#allocation8 + $0x18] sm:$0xf]
        %v763 = vld [vmem:[#allocation8 + $0x1c] sm:$0xf]
        %v764 = vld [vmem:[#allocation8 + $0x20] sm:$0xf]
        %v765 = vld [vmem:[#allocation8 + $0x24] sm:$0xf]
        %v766 = vld [vmem:[#allocation8 + $0x28] sm:$0xf]
        %v767 = vld [vmem:[#allocation8 + $0x2c] sm:$0xf]
        %v768 = vld [vmem:[#allocation8 + $0x30] sm:$0xf]
        %v769 = vld [vmem:[#allocation8 + $0x34] sm:$0xf]
        %v770 = vld [vmem:[#allocation8 + $0x38] sm:$0xf]
        %v771 = vld [vmem:[#allocation8 + $0x3c] sm:$0xf]
        %v772 = vld [vmem:[%s6] sm:$0x1]
        %v774 = vlaneseq
        %v775 = vshrl.u32 %v774, 7
        %v776 = vsub.s32 0, %v775
        %v777 = vrot.slane %v772, %v776
        %v795 = vunpack.c.l.b16 %v756
        %v796 = vunpack.c.l.b16 %v757
        %v797 = vunpack.c.l.b16 %v758
        %v798 = vunpack.c.l.b16 %v759
        %v799 = vunpack.c.l.b16 %v760
        %v800 = vunpack.c.l.b16 %v761
        %v801 = vunpack.c.l.b16 %v762
        %v802 = vunpack.c.l.b16 %v763
        %v803 = vunpack.c.l.b16 %v764
        %v804 = vunpack.c.l.b16 %v765
        %v805 = vunpack.c.l.b16 %v766
        %v806 = vunpack.c.l.b16 %v767
        %v807 = vunpack.c.l.b16 %v768
        %v808 = vunpack.c.l.b16 %v769
        %v809 = vunpack.c.l.b16 %v770
        %v810 = vunpack.c.l.b16 %v771
        %v811 = vpack.c.b16 %v796, %v795
        %v812 = vpack.c.b16 %v798, %v797
        %v813 = vpack.c.b16 %v800, %v799
        %v814 = vpack.c.b16 %v802, %v801
        %v815 = vpack.c.b16 %v804, %v803
        %v816 = vpack.c.b16 %v806, %v805
        %v817 = vpack.c.b16 %v808, %v807
        %v818 = vpack.c.b16 %v810, %v809
        %827 = vmatprep.subr.bf16.mxu0 0
        %828 = vmatpush1.bf16.msra.mxu0 %v811
        %829 = vmatprep.subr.bf16.mxu0 0
        %830 = vmatpush1.bf16.msra.mxu0 %v812
        %831 = vmatprep.subr.bf16.mxu0 0
        %832 = vmatpush1.bf16.msra.mxu0 %v813
        %833 = vmatprep.subr.bf16.mxu0 0
        %834 = vmatpush1.bf16.msra.mxu0 %v814
        %835 = vmatprep.subr.bf16.mxu0 0
        %836 = vmatpush1.bf16.msra.mxu0 %v815
        %837 = vmatprep.subr.bf16.mxu0 0
        %838 = vmatpush1.bf16.msra.mxu0 %v816
        %839 = vmatprep.subr.bf16.mxu0 0
        %840 = vmatpush1.bf16.msra.mxu0 %v817
        %841 = vmatprep.subr.bf16.mxu0 0
        %842 = vmatpush1.bf16.msra.mxu0 %v818
        %843 = vmatprep.subr.bf16.mxu0 0
        %844 = vmatpush1.bf16.msra.mxu0 0
        %845 = vmatprep.subr.bf16.mxu0 0
        %846 = vmatpush1.bf16.msra.mxu0 0
        %847 = vmatprep.subr.bf16.mxu0 0
        %848 = vmatpush1.bf16.msra.mxu0 0
        %849 = vmatprep.subr.bf16.mxu0 0
        %850 = vmatpush1.bf16.msra.mxu0 0
        %851 = vmatprep.subr.bf16.mxu0 0
        %852 = vmatpush1.bf16.msra.mxu0 0
        %853 = vmatprep.subr.bf16.mxu0 0
        %854 = vmatpush1.bf16.msra.mxu0 0
        %855 = vmatprep.subr.bf16.mxu0 0
        %856 = vmatpush1.bf16.msra.mxu0 0
        %857 = vmatprep.subr.bf16.mxu0 0
        %858 = vmatpush1.bf16.msra.mxu0 0
        %859 = vmatprep.mubr.bf16.mxu0 0
        %860 = vmatmul.mubr.bf16.gmra.mrb[0].mxu0 %v391
        %v861 = vpop.f32.mrb[0].mxu0
        %v862 = vadd.f32 %v777, %v861
        %v863 = vpop.f32.mrb[0].mxu0
        %v864 = vpop.f32.mrb[0].mxu0
        %v865 = vadd.f32 %v777, %v864
        %v866 = vpop.f32.mrb[0].mxu0
        %867 = vdwg.mxu0
        %v868 = vadd.f32 %v754, %v862
        %v869 = vadd.f32 %v755, %v865
        %v870 = vmax.f32 %v868, 0.0
        %v871 = vmax.f32 %v869, 0.0
        %v872 = vrot.slane %v870, 6
        %v873 = vrot.slane %v871, 6
        %vm874 = vcmp.lt.s32.totalorder %v345, 2
        %v875 = vsel %vm874, %v872, %v873
        %v876 = vsel %vm874, %v873, %v872
        %v877 = vsel %vm373, 1, 0
        %v878 = vsel %vm374, 1, 0
        %vm879 = vcmp.eq.s32.totalorder %v877, 1
        %vm880 = vcmp.eq.s32.totalorder %v878, 1
        %v881 = vsel %vm879, %v876, 0.0
        %v882 = vsel %vm880, %v875, 0.0
        %v883 = vpack.c.bf16 %v882, %v881
        %v884 = vpack.c.bf16 %v871, %v870
        %s885 = scalar_lea.vmem [#allocation5], 128
        %v886 = vld [vmem:[%s885] sm:$0xf]
        %v887 = vld [vmem:[%s885 + $0x4] sm:$0xf]
        %v888 = vld [vmem:[%s885 + $0x8] sm:$0xf]
        %v889 = vld [vmem:[%s885 + $0xc] sm:$0xf]
        %v890 = vld [vmem:[%s885 + $0x10] sm:$0xf]
        %v891 = vld [vmem:[%s885 + $0x14] sm:$0xf]
        %v892 = vld [vmem:[%s885 + $0x18] sm:$0xf]
        %v893 = vld [vmem:[%s885 + $0x1c] sm:$0xf]
        %v894 = vld [vmem:[%s885 + $0x20] sm:$0xf]
        %v895 = vld [vmem:[%s885 + $0x24] sm:$0xf]
        %v896 = vld [vmem:[%s885 + $0x28] sm:$0xf]
        %v897 = vld [vmem:[%s885 + $0x2c] sm:$0xf]
        %v898 = vld [vmem:[%s885 + $0x30] sm:$0xf]
        %v899 = vld [vmem:[%s885 + $0x34] sm:$0xf]
        %v900 = vld [vmem:[%s885 + $0x38] sm:$0xf]
        %v901 = vld [vmem:[%s885 + $0x3c] sm:$0xf]
        %v902 = vld [vmem:[%s885 + $0x40] sm:$0xf]
        %v903 = vld [vmem:[%s885 + $0x44] sm:$0xf]
        %v904 = vld [vmem:[%s885 + $0x48] sm:$0xf]
        %v905 = vld [vmem:[%s885 + $0x4c] sm:$0xf]
        %v906 = vld [vmem:[%s885 + $0x50] sm:$0xf]
        %v907 = vld [vmem:[%s885 + $0x54] sm:$0xf]
        %v908 = vld [vmem:[%s885 + $0x58] sm:$0xf]
        %v909 = vld [vmem:[%s885 + $0x5c] sm:$0xf]
        %v910 = vld [vmem:[%s885 + $0x60] sm:$0xf]
        %v911 = vld [vmem:[%s885 + $0x64] sm:$0xf]
        %v912 = vld [vmem:[%s885 + $0x68] sm:$0xf]
        %v913 = vld [vmem:[%s885 + $0x6c] sm:$0xf]
        %v914 = vld [vmem:[%s885 + $0x70] sm:$0xf]
        %v915 = vld [vmem:[%s885 + $0x74] sm:$0xf]
        %v916 = vld [vmem:[%s885 + $0x78] sm:$0xf]
        %v917 = vld [vmem:[%s885 + $0x7c] sm:$0xf]
        %s918 = scalar_lea.vmem %s2, 1
        %v919 = vld [vmem:[%s918] sm:$0x1]
        %v921 = vlaneseq
        %v922 = vshrl.u32 %v921, 7
        %v923 = vsub.s32 0, %v922
        %v924 = vrot.slane %v919, %v923
        %v958 = vunpack.c.l.b16 %v886
        %v959 = vunpack.c.l.b16 %v887
        %v960 = vunpack.c.l.b16 %v888
        %v961 = vunpack.c.l.b16 %v889
        %v962 = vunpack.c.l.b16 %v890
        %v963 = vunpack.c.l.b16 %v891
        %v964 = vunpack.c.l.b16 %v892
        %v965 = vunpack.c.l.b16 %v893
        %v966 = vunpack.c.l.b16 %v894
        %v967 = vunpack.c.l.b16 %v895
        %v968 = vunpack.c.l.b16 %v896
        %v969 = vunpack.c.l.b16 %v897
        %v970 = vunpack.c.l.b16 %v898
        %v971 = vunpack.c.l.b16 %v899
        %v972 = vunpack.c.l.b16 %v900
        %v973 = vunpack.c.l.b16 %v901
        %v974 = vunpack.c.l.b16 %v902
        %v975 = vunpack.c.l.b16 %v903
        %v976 = vunpack.c.l.b16 %v904
        %v977 = vunpack.c.l.b16 %v905
        %v978 = vunpack.c.l.b16 %v906
        %v979 = vunpack.c.l.b16 %v907
        %v980 = vunpack.c.l.b16 %v908
        %v981 = vunpack.c.l.b16 %v909
        %v982 = vunpack.c.l.b16 %v910
        %v983 = vunpack.c.l.b16 %v911
        %v984 = vunpack.c.l.b16 %v912
        %v985 = vunpack.c.l.b16 %v913
        %v986 = vunpack.c.l.b16 %v914
        %v987 = vunpack.c.l.b16 %v915
        %v988 = vunpack.c.l.b16 %v916
        %v989 = vunpack.c.l.b16 %v917
        %v990 = vpack.c.b16 %v959, %v958
        %v991 = vpack.c.b16 %v961, %v960
        %v992 = vpack.c.b16 %v963, %v962
        %v993 = vpack.c.b16 %v965, %v964
        %v994 = vpack.c.b16 %v967, %v966
        %v995 = vpack.c.b16 %v969, %v968
        %v996 = vpack.c.b16 %v971, %v970
        %v997 = vpack.c.b16 %v973, %v972
        %v998 = vpack.c.b16 %v975, %v974
        %v999 = vpack.c.b16 %v977, %v976
        %v1000 = vpack.c.b16 %v979, %v978
        %v1001 = vpack.c.b16 %v981, %v980
        %v1002 = vpack.c.b16 %v983, %v982
        %v1003 = vpack.c.b16 %v985, %v984
        %v1004 = vpack.c.b16 %v987, %v986
        %v1005 = vpack.c.b16 %v989, %v988
        %1022 = vmatprep.subr.bf16.mxu0 0
        %1023 = vmatpush1.bf16.msra.mxu0 %v990
        %1024 = vmatprep.subr.bf16.mxu0 0
        %1025 = vmatpush1.bf16.msra.mxu0 %v991
        %1026 = vmatprep.subr.bf16.mxu0 0
        %1027 = vmatpush1.bf16.msra.mxu0 %v992
        %1028 = vmatprep.subr.bf16.mxu0 0
        %1029 = vmatpush1.bf16.msra.mxu0 %v993
        %1030 = vmatprep.subr.bf16.mxu0 0
        %1031 = vmatpush1.bf16.msra.mxu0 %v994
        %1032 = vmatprep.subr.bf16.mxu0 0
        %1033 = vmatpush1.bf16.msra.mxu0 %v995
        %1034 = vmatprep.subr.bf16.mxu0 0
        %1035 = vmatpush1.bf16.msra.mxu0 %v996
        %1036 = vmatprep.subr.bf16.mxu0 0
        %1037 = vmatpush1.bf16.msra.mxu0 %v997
        %1038 = vmatprep.subr.bf16.mxu0 0
        %1039 = vmatpush1.bf16.msra.mxu0 %v998
        %1040 = vmatprep.subr.bf16.mxu0 0
        %1041 = vmatpush1.bf16.msra.mxu0 %v999
        %1042 = vmatprep.subr.bf16.mxu0 0
        %1043 = vmatpush1.bf16.msra.mxu0 %v1000
        %1044 = vmatprep.subr.bf16.mxu0 0
        %1045 = vmatpush1.bf16.msra.mxu0 %v1001
        %1046 = vmatprep.subr.bf16.mxu0 0
        %1047 = vmatpush1.bf16.msra.mxu0 %v1002
        %1048 = vmatprep.subr.bf16.mxu0 0
        %1049 = vmatpush1.bf16.msra.mxu0 %v1003
        %1050 = vmatprep.subr.bf16.mxu0 0
        %1051 = vmatpush1.bf16.msra.mxu0 %v1004
        %1052 = vmatprep.subr.bf16.mxu0 0
        %1053 = vmatpush1.bf16.msra.mxu0 %v1005
        %1054 = vmatprep.mubr.bf16.mxu0 %v884
        %1055 = vmatmul.mubr.bf16.gmra.mrb[0].mxu0 %v883
        %v1056 = vpop.f32.mrb[0].mxu0
        %v1057 = vadd.f32 %v924, %v1056
        %v1058 = vpop.f32.mrb[0].mxu0
        %v1059 = vpop.f32.mrb[0].mxu0
        %v1060 = vadd.f32 %v924, %v1059
        %v1061 = vpop.f32.mrb[0].mxu0
        %1062 = vdwg.mxu0
        %v1063 = vmax.f32 %v1057, 0.0
        %v1064 = vmax.f32 %v1060, 0.0
        %v1065 = vrot.slane %v1063, 6
        %v1066 = vrot.slane %v1064, 6
        %v1067 = vsel %vm874, %v1065, %v1066
        %v1068 = vsel %vm874, %v1066, %v1065
        %v1069 = vsel %vm879, %v1068, 0.0
        %v1070 = vsel %vm880, %v1067, 0.0
        %v1071 = vpack.c.bf16 %v1070, %v1069
        %v1072 = vpack.c.bf16 %v1064, %v1063
        %s1073 = scalar_lea.vmem [#allocation7], 128
        %v1074 = vld [vmem:[%s1073] sm:$0xf]
        %v1075 = vld [vmem:[%s1073 + $0x4] sm:$0xf]
        %v1076 = vld [vmem:[%s1073 + $0x8] sm:$0xf]
        %v1077 = vld [vmem:[%s1073 + $0xc] sm:$0xf]
        %v1078 = vld [vmem:[%s1073 + $0x10] sm:$0xf]
        %v1079 = vld [vmem:[%s1073 + $0x14] sm:$0xf]
        %v1080 = vld [vmem:[%s1073 + $0x18] sm:$0xf]
        %v1081 = vld [vmem:[%s1073 + $0x1c] sm:$0xf]
        %v1082 = vld [vmem:[%s1073 + $0x20] sm:$0xf]
        %v1083 = vld [vmem:[%s1073 + $0x24] sm:$0xf]
        %v1084 = vld [vmem:[%s1073 + $0x28] sm:$0xf]
        %v1085 = vld [vmem:[%s1073 + $0x2c] sm:$0xf]
        %v1086 = vld [vmem:[%s1073 + $0x30] sm:$0xf]
        %v1087 = vld [vmem:[%s1073 + $0x34] sm:$0xf]
        %v1088 = vld [vmem:[%s1073 + $0x38] sm:$0xf]
        %v1089 = vld [vmem:[%s1073 + $0x3c] sm:$0xf]
        %v1090 = vld [vmem:[%s1073 + $0x40] sm:$0xf]
        %v1091 = vld [vmem:[%s1073 + $0x44] sm:$0xf]
        %v1092 = vld [vmem:[%s1073 + $0x48] sm:$0xf]
        %v1093 = vld [vmem:[%s1073 + $0x4c] sm:$0xf]
        %v1094 = vld [vmem:[%s1073 + $0x50] sm:$0xf]
        %v1095 = vld [vmem:[%s1073 + $0x54] sm:$0xf]
        %v1096 = vld [vmem:[%s1073 + $0x58] sm:$0xf]
        %v1097 = vld [vmem:[%s1073 + $0x5c] sm:$0xf]
        %v1098 = vld [vmem:[%s1073 + $0x60] sm:$0xf]
        %v1099 = vld [vmem:[%s1073 + $0x64] sm:$0xf]
        %v1100 = vld [vmem:[%s1073 + $0x68] sm:$0xf]
        %v1101 = vld [vmem:[%s1073 + $0x6c] sm:$0xf]
        %v1102 = vld [vmem:[%s1073 + $0x70] sm:$0xf]
        %v1103 = vld [vmem:[%s1073 + $0x74] sm:$0xf]
        %v1104 = vld [vmem:[%s1073 + $0x78] sm:$0xf]
        %v1105 = vld [vmem:[%s1073 + $0x7c] sm:$0xf]
        %s1106 = scalar_lea.vmem %s4, 1
        %v1107 = vld [vmem:[%s1106] sm:$0x1]
        %v1109 = vlaneseq
        %v1110 = vshrl.u32 %v1109, 7
        %v1111 = vsub.s32 0, %v1110
        %v1112 = vrot.slane %v1107, %v1111
        %v1146 = vunpack.c.l.b16 %v1074
        %v1147 = vunpack.c.l.b16 %v1075
        %v1148 = vunpack.c.l.b16 %v1076
        %v1149 = vunpack.c.l.b16 %v1077
        %v1150 = vunpack.c.l.b16 %v1078
        %v1151 = vunpack.c.l.b16 %v1079
        %v1152 = vunpack.c.l.b16 %v1080
        %v1153 = vunpack.c.l.b16 %v1081
        %v1154 = vunpack.c.l.b16 %v1082
        %v1155 = vunpack.c.l.b16 %v1083
        %v1156 = vunpack.c.l.b16 %v1084
        %v1157 = vunpack.c.l.b16 %v1085
        %v1158 = vunpack.c.l.b16 %v1086
        %v1159 = vunpack.c.l.b16 %v1087
        %v1160 = vunpack.c.l.b16 %v1088
        %v1161 = vunpack.c.l.b16 %v1089
        %v1162 = vunpack.c.l.b16 %v1090
        %v1163 = vunpack.c.l.b16 %v1091
        %v1164 = vunpack.c.l.b16 %v1092
        %v1165 = vunpack.c.l.b16 %v1093
        %v1166 = vunpack.c.l.b16 %v1094
        %v1167 = vunpack.c.l.b16 %v1095
        %v1168 = vunpack.c.l.b16 %v1096
        %v1169 = vunpack.c.l.b16 %v1097
        %v1170 = vunpack.c.l.b16 %v1098
        %v1171 = vunpack.c.l.b16 %v1099
        %v1172 = vunpack.c.l.b16 %v1100
        %v1173 = vunpack.c.l.b16 %v1101
        %v1174 = vunpack.c.l.b16 %v1102
        %v1175 = vunpack.c.l.b16 %v1103
        %v1176 = vunpack.c.l.b16 %v1104
        %v1177 = vunpack.c.l.b16 %v1105
        %v1178 = vpack.c.b16 %v1147, %v1146
        %v1179 = vpack.c.b16 %v1149, %v1148
        %v1180 = vpack.c.b16 %v1151, %v1150
        %v1181 = vpack.c.b16 %v1153, %v1152
        %v1182 = vpack.c.b16 %v1155, %v1154
        %v1183 = vpack.c.b16 %v1157, %v1156
        %v1184 = vpack.c.b16 %v1159, %v1158
        %v1185 = vpack.c.b16 %v1161, %v1160
        %v1186 = vpack.c.b16 %v1163, %v1162
        %v1187 = vpack.c.b16 %v1165, %v1164
        %v1188 = vpack.c.b16 %v1167, %v1166
        %v1189 = vpack.c.b16 %v1169, %v1168
        %v1190 = vpack.c.b16 %v1171, %v1170
        %v1191 = vpack.c.b16 %v1173, %v1172
        %v1192 = vpack.c.b16 %v1175, %v1174
        %v1193 = vpack.c.b16 %v1177, %v1176
        %1210 = vmatprep.subr.bf16.mxu0 0
        %1211 = vmatpush1.bf16.msra.mxu0 %v1178
        %1212 = vmatprep.subr.bf16.mxu0 0
        %1213 = vmatpush1.bf16.msra.mxu0 %v1179
        %1214 = vmatprep.subr.bf16.mxu0 0
        %1215 = vmatpush1.bf16.msra.mxu0 %v1180
        %1216 = vmatprep.subr.bf16.mxu0 0
        %1217 = vmatpush1.bf16.msra.mxu0 %v1181
        %1218 = vmatprep.subr.bf16.mxu0 0
        %1219 = vmatpush1.bf16.msra.mxu0 %v1182
        %1220 = vmatprep.subr.bf16.mxu0 0
        %1221 = vmatpush1.bf16.msra.mxu0 %v1183
        %1222 = vmatprep.subr.bf16.mxu0 0
        %1223 = vmatpush1.bf16.msra.mxu0 %v1184
        %1224 = vmatprep.subr.bf16.mxu0 0
        %1225 = vmatpush1.bf16.msra.mxu0 %v1185
        %1226 = vmatprep.subr.bf16.mxu0 0
        %1227 = vmatpush1.bf16.msra.mxu0 %v1186
        %1228 = vmatprep.subr.bf16.mxu0 0
        %1229 = vmatpush1.bf16.msra.mxu0 %v1187
        %1230 = vmatprep.subr.bf16.mxu0 0
        %1231 = vmatpush1.bf16.msra.mxu0 %v1188
        %1232 = vmatprep.subr.bf16.mxu0 0
        %1233 = vmatpush1.bf16.msra.mxu0 %v1189
        %1234 = vmatprep.subr.bf16.mxu0 0
        %1235 = vmatpush1.bf16.msra.mxu0 %v1190
        %1236 = vmatprep.subr.bf16.mxu0 0
        %1237 = vmatpush1.bf16.msra.mxu0 %v1191
        %1238 = vmatprep.subr.bf16.mxu0 0
        %1239 = vmatpush1.bf16.msra.mxu0 %v1192
        %1240 = vmatprep.subr.bf16.mxu0 0
        %1241 = vmatpush1.bf16.msra.mxu0 %v1193
        %1242 = vmatprep.mubr.bf16.mxu0 %v1072
        %1243 = vmatmul.mubr.bf16.gmra.mrb[0].mxu0 %v1071
        %v1244 = vpop.f32.mrb[0].mxu0
        %v1245 = vadd.f32 %v1112, %v1244
        %v1246 = vpop.f32.mrb[0].mxu0
        %v1247 = vpop.f32.mrb[0].mxu0
        %v1248 = vadd.f32 %v1112, %v1247
        %v1249 = vpop.f32.mrb[0].mxu0
        %1250 = vdwg.mxu0
        %v1251 = vmax.f32 %v1245, 0.0
        %v1252 = vmax.f32 %v1248, 0.0
        %v1253 = vadd.f32 %v1251, %v870
        %v1254 = vadd.f32 %v1252, %v871
        %v1255 = vmax.f32 %v1253, 0.0
        %v1256 = vmax.f32 %v1254, 0.0
        %v1257 = vrot.slane %v1255, 4
        %v1258 = vrot.slane %v1256, 4
        %vm1259 = vcmp.lt.s32.totalorder %v345, 4
        %v1260 = vsel %vm1259, %v1257, %v1258
        %v1261 = vsel %vm1259, %v1258, %v1257
        %v1262 = vsel %vm375, 1, 0
        %v1263 = vsel %vm376, 1, 0
        %vm1264 = vcmp.eq.s32.totalorder %v1262, 1
        %vm1265 = vcmp.eq.s32.totalorder %v1263, 1
        %v1266 = vsel %vm1264, %v1261, 0.0
        %v1267 = vsel %vm1265, %v1260, 0.0
        %v1268 = vpack.c.bf16 %v1267, %v1266
        %v1269 = vpack.c.bf16 %v1256, %v1255
        %s1270 = scalar_lea.vmem [#allocation5], 256
        %v1271 = vld [vmem:[%s1270] sm:$0xf]
        %v1272 = vld [vmem:[%s1270 + $0x4] sm:$0xf]
        %v1273 = vld [vmem:[%s1270 + $0x8] sm:$0xf]
        %v1274 = vld [vmem:[%s1270 + $0xc] sm:$0xf]
        %v1275 = vld [vmem:[%s1270 + $0x10] sm:$0xf]
        %v1276 = vld [vmem:[%s1270 + $0x14] sm:$0xf]
        %v1277 = vld [vmem:[%s1270 + $0x18] sm:$0xf]
        %v1278 = vld [vmem:[%s1270 + $0x1c] sm:$0xf]
        %v1279 = vld [vmem:[%s1270 + $0x20] sm:$0xf]
        %v1280 = vld [vmem:[%s1270 + $0x24] sm:$0xf]
        %v1281 = vld [vmem:[%s1270 + $0x28] sm:$0xf]
        %v1282 = vld [vmem:[%s1270 + $0x2c] sm:$0xf]
        %v1283 = vld [vmem:[%s1270 + $0x30] sm:$0xf]
        %v1284 = vld [vmem:[%s1270 + $0x34] sm:$0xf]
        %v1285 = vld [vmem:[%s1270 + $0x38] sm:$0xf]
        %v1286 = vld [vmem:[%s1270 + $0x3c] sm:$0xf]
        %v1287 = vld [vmem:[%s1270 + $0x40] sm:$0xf]
        %v1288 = vld [vmem:[%s1270 + $0x44] sm:$0xf]
        %v1289 = vld [vmem:[%s1270 + $0x48] sm:$0xf]
        %v1290 = vld [vmem:[%s1270 + $0x4c] sm:$0xf]
        %v1291 = vld [vmem:[%s1270 + $0x50] sm:$0xf]
        %v1292 = vld [vmem:[%s1270 + $0x54] sm:$0xf]
        %v1293 = vld [vmem:[%s1270 + $0x58] sm:$0xf]
        %v1294 = vld [vmem:[%s1270 + $0x5c] sm:$0xf]
        %v1295 = vld [vmem:[%s1270 + $0x60] sm:$0xf]
        %v1296 = vld [vmem:[%s1270 + $0x64] sm:$0xf]
        %v1297 = vld [vmem:[%s1270 + $0x68] sm:$0xf]
        %v1298 = vld [vmem:[%s1270 + $0x6c] sm:$0xf]
        %v1299 = vld [vmem:[%s1270 + $0x70] sm:$0xf]
        %v1300 = vld [vmem:[%s1270 + $0x74] sm:$0xf]
        %v1301 = vld [vmem:[%s1270 + $0x78] sm:$0xf]
        %v1302 = vld [vmem:[%s1270 + $0x7c] sm:$0xf]
        %s1303 = scalar_lea.vmem %s2, 2
        %v1304 = vld [vmem:[%s1303] sm:$0x1]
        %v1306 = vlaneseq
        %v1307 = vshrl.u32 %v1306, 7
        %v1308 = vsub.s32 0, %v1307
        %v1309 = vrot.slane %v1304, %v1308
        %v1343 = vunpack.c.l.b16 %v1271
        %v1344 = vunpack.c.l.b16 %v1272
        %v1345 = vunpack.c.l.b16 %v1273
        %v1346 = vunpack.c.l.b16 %v1274
        %v1347 = vunpack.c.l.b16 %v1275
        %v1348 = vunpack.c.l.b16 %v1276
        %v1349 = vunpack.c.l.b16 %v1277
        %v1350 = vunpack.c.l.b16 %v1278
        %v1351 = vunpack.c.l.b16 %v1279
        %v1352 = vunpack.c.l.b16 %v1280
        %v1353 = vunpack.c.l.b16 %v1281
        %v1354 = vunpack.c.l.b16 %v1282
        %v1355 = vunpack.c.l.b16 %v1283
        %v1356 = vunpack.c.l.b16 %v1284
        %v1357 = vunpack.c.l.b16 %v1285
        %v1358 = vunpack.c.l.b16 %v1286
        %v1359 = vunpack.c.l.b16 %v1287
        %v1360 = vunpack.c.l.b16 %v1288
        %v1361 = vunpack.c.l.b16 %v1289
        %v1362 = vunpack.c.l.b16 %v1290
        %v1363 = vunpack.c.l.b16 %v1291
        %v1364 = vunpack.c.l.b16 %v1292
        %v1365 = vunpack.c.l.b16 %v1293
        %v1366 = vunpack.c.l.b16 %v1294
        %v1367 = vunpack.c.l.b16 %v1295
        %v1368 = vunpack.c.l.b16 %v1296
        %v1369 = vunpack.c.l.b16 %v1297
        %v1370 = vunpack.c.l.b16 %v1298
        %v1371 = vunpack.c.l.b16 %v1299
        %v1372 = vunpack.c.l.b16 %v1300
        %v1373 = vunpack.c.l.b16 %v1301
        %v1374 = vunpack.c.l.b16 %v1302
        %v1375 = vpack.c.b16 %v1344, %v1343
        %v1376 = vpack.c.b16 %v1346, %v1345
        %v1377 = vpack.c.b16 %v1348, %v1347
        %v1378 = vpack.c.b16 %v1350, %v1349
        %v1379 = vpack.c.b16 %v1352, %v1351
        %v1380 = vpack.c.b16 %v1354, %v1353
        %v1381 = vpack.c.b16 %v1356, %v1355
        %v1382 = vpack.c.b16 %v1358, %v1357
        %v1383 = vpack.c.b16 %v1360, %v1359
        %v1384 = vpack.c.b16 %v1362, %v1361
        %v1385 = vpack.c.b16 %v1364, %v1363
        %v1386 = vpack.c.b16 %v1366, %v1365
        %v1387 = vpack.c.b16 %v1368, %v1367
        %v1388 = vpack.c.b16 %v1370, %v1369
        %v1389 = vpack.c.b16 %v1372, %v1371
        %v1390 = vpack.c.b16 %v1374, %v1373
        %1407 = vmatprep.subr.bf16.mxu0 0
        %1408 = vmatpush1.bf16.msra.mxu0 %v1375
        %1409 = vmatprep.subr.bf16.mxu0 0
        %1410 = vmatpush1.bf16.msra.mxu0 %v1376
        %1411 = vmatprep.subr.bf16.mxu0 0
        %1412 = vmatpush1.bf16.msra.mxu0 %v1377
        %1413 = vmatprep.subr.bf16.mxu0 0
        %1414 = vmatpush1.bf16.msra.mxu0 %v1378
        %1415 = vmatprep.subr.bf16.mxu0 0
        %1416 = vmatpush1.bf16.msra.mxu0 %v1379
        %1417 = vmatprep.subr.bf16.mxu0 0
        %1418 = vmatpush1.bf16.msra.mxu0 %v1380
        %1419 = vmatprep.subr.bf16.mxu0 0
        %1420 = vmatpush1.bf16.msra.mxu0 %v1381
        %1421 = vmatprep.subr.bf16.mxu0 0
        %1422 = vmatpush1.bf16.msra.mxu0 %v1382
        %1423 = vmatprep.subr.bf16.mxu0 0
        %1424 = vmatpush1.bf16.msra.mxu0 %v1383
        %1425 = vmatprep.subr.bf16.mxu0 0
        %1426 = vmatpush1.bf16.msra.mxu0 %v1384
        %1427 = vmatprep.subr.bf16.mxu0 0
        %1428 = vmatpush1.bf16.msra.mxu0 %v1385
        %1429 = vmatprep.subr.bf16.mxu0 0
        %1430 = vmatpush1.bf16.msra.mxu0 %v1386
        %1431 = vmatprep.subr.bf16.mxu0 0
        %1432 = vmatpush1.bf16.msra.mxu0 %v1387
        %1433 = vmatprep.subr.bf16.mxu0 0
        %1434 = vmatpush1.bf16.msra.mxu0 %v1388
        %1435 = vmatprep.subr.bf16.mxu0 0
        %1436 = vmatpush1.bf16.msra.mxu0 %v1389
        %1437 = vmatprep.subr.bf16.mxu0 0
        %1438 = vmatpush1.bf16.msra.mxu0 %v1390
        %1439 = vmatprep.mubr.bf16.mxu0 %v1269
        %1440 = vmatmul.mubr.bf16.gmra.mrb[0].mxu0 %v1268
        %v1441 = vpop.f32.mrb[0].mxu0
        %v1442 = vadd.f32 %v1309, %v1441
        %v1443 = vpop.f32.mrb[0].mxu0
        %v1444 = vpop.f32.mrb[0].mxu0
        %v1445 = vadd.f32 %v1309, %v1444
        %v1446 = vpop.f32.mrb[0].mxu0
        %1447 = vdwg.mxu0
        %v1448 = vmax.f32 %v1442, 0.0
        %v1449 = vmax.f32 %v1445, 0.0
        %v1450 = vrot.slane %v1448, 4
        %v1451 = vrot.slane %v1449, 4
        %v1452 = vsel %vm1259, %v1450, %v1451
        %v1453 = vsel %vm1259, %v1451, %v1450
        %v1454 = vsel %vm1264, %v1453, 0.0
        %v1455 = vsel %vm1265, %v1452, 0.0
        %v1456 = vpack.c.bf16 %v1455, %v1454
        %v1457 = vpack.c.bf16 %v1449, %v1448
        %s1458 = scalar_lea.vmem [#allocation7], 256
        %v1459 = vld [vmem:[%s1458] sm:$0xf]
        %v1460 = vld [vmem:[%s1458 + $0x4] sm:$0xf]
        %v1461 = vld [vmem:[%s1458 + $0x8] sm:$0xf]
        %v1462 = vld [vmem:[%s1458 + $0xc] sm:$0xf]
        %v1463 = vld [vmem:[%s1458 + $0x10] sm:$0xf]
        %v1464 = vld [vmem:[%s1458 + $0x14] sm:$0xf]
        %v1465 = vld [vmem:[%s1458 + $0x18] sm:$0xf]
        %v1466 = vld [vmem:[%s1458 + $0x1c] sm:$0xf]
        %v1467 = vld [vmem:[%s1458 + $0x20] sm:$0xf]
        %v1468 = vld [vmem:[%s1458 + $0x24] sm:$0xf]
        %v1469 = vld [vmem:[%s1458 + $0x28] sm:$0xf]
        %v1470 = vld [vmem:[%s1458 + $0x2c] sm:$0xf]
        %v1471 = vld [vmem:[%s1458 + $0x30] sm:$0xf]
        %v1472 = vld [vmem:[%s1458 + $0x34] sm:$0xf]
        %v1473 = vld [vmem:[%s1458 + $0x38] sm:$0xf]
        %v1474 = vld [vmem:[%s1458 + $0x3c] sm:$0xf]
        %v1475 = vld [vmem:[%s1458 + $0x40] sm:$0xf]
        %v1476 = vld [vmem:[%s1458 + $0x44] sm:$0xf]
        %v1477 = vld [vmem:[%s1458 + $0x48] sm:$0xf]
        %v1478 = vld [vmem:[%s1458 + $0x4c] sm:$0xf]
        %v1479 = vld [vmem:[%s1458 + $0x50] sm:$0xf]
        %v1480 = vld [vmem:[%s1458 + $0x54] sm:$0xf]
        %v1481 = vld [vmem:[%s1458 + $0x58] sm:$0xf]
        %v1482 = vld [vmem:[%s1458 + $0x5c] sm:$0xf]
        %v1483 = vld [vmem:[%s1458 + $0x60] sm:$0xf]
        %v1484 = vld [vmem:[%s1458 + $0x64] sm:$0xf]
        %v1485 = vld [vmem:[%s1458 + $0x68] sm:$0xf]
        %v1486 = vld [vmem:[%s1458 + $0x6c] sm:$0xf]
        %v1487 = vld [vmem:[%s1458 + $0x70] sm:$0xf]
        %v1488 = vld [vmem:[%s1458 + $0x74] sm:$0xf]
        %v1489 = vld [vmem:[%s1458 + $0x78] sm:$0xf]
        %v1490 = vld [vmem:[%s1458 + $0x7c] sm:$0xf]
        %s1491 = scalar_lea.vmem %s4, 2
        %v1492 = vld [vmem:[%s1491] sm:$0x1]
        %v1494 = vlaneseq
        %v1495 = vshrl.u32 %v1494, 7
        %v1496 = vsub.s32 0, %v1495
        %v1497 = vrot.slane %v1492, %v1496
        %v1531 = vunpack.c.l.b16 %v1459
        %v1532 = vunpack.c.l.b16 %v1460
        %v1533 = vunpack.c.l.b16 %v1461
        %v1534 = vunpack.c.l.b16 %v1462
        %v1535 = vunpack.c.l.b16 %v1463
        %v1536 = vunpack.c.l.b16 %v1464
        %v1537 = vunpack.c.l.b16 %v1465
        %v1538 = vunpack.c.l.b16 %v1466
        %v1539 = vunpack.c.l.b16 %v1467
        %v1540 = vunpack.c.l.b16 %v1468
        %v1541 = vunpack.c.l.b16 %v1469
        %v1542 = vunpack.c.l.b16 %v1470
        %v1543 = vunpack.c.l.b16 %v1471
        %v1544 = vunpack.c.l.b16 %v1472
        %v1545 = vunpack.c.l.b16 %v1473
        %v1546 = vunpack.c.l.b16 %v1474
        %v1547 = vunpack.c.l.b16 %v1475
        %v1548 = vunpack.c.l.b16 %v1476
        %v1549 = vunpack.c.l.b16 %v1477
        %v1550 = vunpack.c.l.b16 %v1478
        %v1551 = vunpack.c.l.b16 %v1479
        %v1552 = vunpack.c.l.b16 %v1480
        %v1553 = vunpack.c.l.b16 %v1481
        %v1554 = vunpack.c.l.b16 %v1482
        %v1555 = vunpack.c.l.b16 %v1483
        %v1556 = vunpack.c.l.b16 %v1484
        %v1557 = vunpack.c.l.b16 %v1485
        %v1558 = vunpack.c.l.b16 %v1486
        %v1559 = vunpack.c.l.b16 %v1487
        %v1560 = vunpack.c.l.b16 %v1488
        %v1561 = vunpack.c.l.b16 %v1489
        %v1562 = vunpack.c.l.b16 %v1490
        %v1563 = vpack.c.b16 %v1532, %v1531
        %v1564 = vpack.c.b16 %v1534, %v1533
        %v1565 = vpack.c.b16 %v1536, %v1535
        %v1566 = vpack.c.b16 %v1538, %v1537
        %v1567 = vpack.c.b16 %v1540, %v1539
        %v1568 = vpack.c.b16 %v1542, %v1541
        %v1569 = vpack.c.b16 %v1544, %v1543
        %v1570 = vpack.c.b16 %v1546, %v1545
        %v1571 = vpack.c.b16 %v1548, %v1547
        %v1572 = vpack.c.b16 %v1550, %v1549
        %v1573 = vpack.c.b16 %v1552, %v1551
        %v1574 = vpack.c.b16 %v1554, %v1553
        %v1575 = vpack.c.b16 %v1556, %v1555
        %v1576 = vpack.c.b16 %v1558, %v1557
        %v1577 = vpack.c.b16 %v1560, %v1559
        %v1578 = vpack.c.b16 %v1562, %v1561
        %1595 = vmatprep.subr.bf16.mxu0 0
        %1596 = vmatpush1.bf16.msra.mxu0 %v1563
        %1597 = vmatprep.subr.bf16.mxu0 0
        %1598 = vmatpush1.bf16.msra.mxu0 %v1564
        %1599 = vmatprep.subr.bf16.mxu0 0
        %1600 = vmatpush1.bf16.msra.mxu0 %v1565
        %1601 = vmatprep.subr.bf16.mxu0 0
        %1602 = vmatpush1.bf16.msra.mxu0 %v1566
        %1603 = vmatprep.subr.bf16.mxu0 0
        %1604 = vmatpush1.bf16.msra.mxu0 %v1567
        %1605 = vmatprep.subr.bf16.mxu0 0
        %1606 = vmatpush1.bf16.msra.mxu0 %v1568
        %1607 = vmatprep.subr.bf16.mxu0 0
        %1608 = vmatpush1.bf16.msra.mxu0 %v1569
        %1609 = vmatprep.subr.bf16.mxu0 0
        %1610 = vmatpush1.bf16.msra.mxu0 %v1570
        %1611 = vmatprep.subr.bf16.mxu0 0
        %1612 = vmatpush1.bf16.msra.mxu0 %v1571
        %1613 = vmatprep.subr.bf16.mxu0 0
        %1614 = vmatpush1.bf16.msra.mxu0 %v1572
        %1615 = vmatprep.subr.bf16.mxu0 0
        %1616 = vmatpush1.bf16.msra.mxu0 %v1573
        %1617 = vmatprep.subr.bf16.mxu0 0
        %1618 = vmatpush1.bf16.msra.mxu0 %v1574
        %1619 = vmatprep.subr.bf16.mxu0 0
        %1620 = vmatpush1.bf16.msra.mxu0 %v1575
        %1621 = vmatprep.subr.bf16.mxu0 0
        %1622 = vmatpush1.bf16.msra.mxu0 %v1576
        %1623 = vmatprep.subr.bf16.mxu0 0
        %1624 = vmatpush1.bf16.msra.mxu0 %v1577
        %1625 = vmatprep.subr.bf16.mxu0 0
        %1626 = vmatpush1.bf16.msra.mxu0 %v1578
        %1627 = vmatprep.mubr.bf16.mxu0 %v1457
        %1628 = vmatmul.mubr.bf16.gmra.mrb[0].mxu0 %v1456
        %v1629 = vpop.f32.mrb[0].mxu0
        %v1630 = vadd.f32 %v1497, %v1629
        %v1631 = vpop.f32.mrb[0].mxu0
        %v1632 = vpop.f32.mrb[0].mxu0
        %v1633 = vadd.f32 %v1497, %v1632
        %v1634 = vpop.f32.mrb[0].mxu0
        %1635 = vdwg.mxu0
        %v1636 = vmax.f32 %v1630, 0.0
        %v1637 = vmax.f32 %v1633, 0.0
        %s1638 = scalar_lea.vmem [#allocation8], 64
        %v1639 = vld [vmem:[%s1638] sm:$0xf]
        %v1640 = vld [vmem:[%s1638 + $0x4] sm:$0xf]
        %v1641 = vld [vmem:[%s1638 + $0x8] sm:$0xf]
        %v1642 = vld [vmem:[%s1638 + $0xc] sm:$0xf]
        %v1643 = vld [vmem:[%s1638 + $0x10] sm:$0xf]
        %v1644 = vld [vmem:[%s1638 + $0x14] sm:$0xf]
        %v1645 = vld [vmem:[%s1638 + $0x18] sm:$0xf]
        %v1646 = vld [vmem:[%s1638 + $0x1c] sm:$0xf]
        %v1647 = vld [vmem:[%s1638 + $0x20] sm:$0xf]
        %v1648 = vld [vmem:[%s1638 + $0x24] sm:$0xf]
        %v1649 = vld [vmem:[%s1638 + $0x28] sm:$0xf]
        %v1650 = vld [vmem:[%s1638 + $0x2c] sm:$0xf]
        %v1651 = vld [vmem:[%s1638 + $0x30] sm:$0xf]
        %v1652 = vld [vmem:[%s1638 + $0x34] sm:$0xf]
        %v1653 = vld [vmem:[%s1638 + $0x38] sm:$0xf]
        %v1654 = vld [vmem:[%s1638 + $0x3c] sm:$0xf]
        %s1655 = scalar_lea.vmem %s6, 1
        %v1656 = vld [vmem:[%s1655] sm:$0x1]
        %v1658 = vlaneseq
        %v1659 = vshrl.u32 %v1658, 7
        %v1660 = vsub.s32 0, %v1659
        %v1661 = vrot.slane %v1656, %v1660
        %v1679 = vunpack.c.l.b16 %v1639
        %v1680 = vunpack.c.l.b16 %v1640
        %v1681 = vunpack.c.l.b16 %v1641
        %v1682 = vunpack.c.l.b16 %v1642
        %v1683 = vunpack.c.l.b16 %v1643
        %v1684 = vunpack.c.l.b16 %v1644
        %v1685 = vunpack.c.l.b16 %v1645
        %v1686 = vunpack.c.l.b16 %v1646
        %v1687 = vunpack.c.l.b16 %v1647
        %v1688 = vunpack.c.l.b16 %v1648
        %v1689 = vunpack.c.l.b16 %v1649
        %v1690 = vunpack.c.l.b16 %v1650
        %v1691 = vunpack.c.l.b16 %v1651
        %v1692 = vunpack.c.l.b16 %v1652
        %v1693 = vunpack.c.l.b16 %v1653
        %v1694 = vunpack.c.l.b16 %v1654
        %v1695 = vpack.c.b16 %v1680, %v1679
        %v1696 = vpack.c.b16 %v1682, %v1681
        %v1697 = vpack.c.b16 %v1684, %v1683
        %v1698 = vpack.c.b16 %v1686, %v1685
        %v1699 = vpack.c.b16 %v1688, %v1687
        %v1700 = vpack.c.b16 %v1690, %v1689
        %v1701 = vpack.c.b16 %v1692, %v1691
        %v1702 = vpack.c.b16 %v1694, %v1693
        %1711 = vmatprep.subr.bf16.mxu0 0
        %1712 = vmatpush1.bf16.msra.mxu0 %v1695
        %1713 = vmatprep.subr.bf16.mxu0 0
        %1714 = vmatpush1.bf16.msra.mxu0 %v1696
        %1715 = vmatprep.subr.bf16.mxu0 0
        %1716 = vmatpush1.bf16.msra.mxu0 %v1697
        %1717 = vmatprep.subr.bf16.mxu0 0
        %1718 = vmatpush1.bf16.msra.mxu0 %v1698
        %1719 = vmatprep.subr.bf16.mxu0 0
        %1720 = vmatpush1.bf16.msra.mxu0 %v1699
        %1721 = vmatprep.subr.bf16.mxu0 0
        %1722 = vmatpush1.bf16.msra.mxu0 %v1700
        %1723 = vmatprep.subr.bf16.mxu0 0
        %1724 = vmatpush1.bf16.msra.mxu0 %v1701
        %1725 = vmatprep.subr.bf16.mxu0 0
        %1726 = vmatpush1.bf16.msra.mxu0 %v1702
        %1727 = vmatprep.subr.bf16.mxu0 0
        %1728 = vmatpush1.bf16.msra.mxu0 0
        %1729 = vmatprep.subr.bf16.mxu0 0
        %1730 = vmatpush1.bf16.msra.mxu0 0
        %1731 = vmatprep.subr.bf16.mxu0 0
        %1732 = vmatpush1.bf16.msra.mxu0 0
        %1733 = vmatprep.subr.bf16.mxu0 0
        %1734 = vmatpush1.bf16.msra.mxu0 0
        %1735 = vmatprep.subr.bf16.mxu0 0
        %1736 = vmatpush1.bf16.msra.mxu0 0
        %1737 = vmatprep.subr.bf16.mxu0 0
        %1738 = vmatpush1.bf16.msra.mxu0 0
        %1739 = vmatprep.subr.bf16.mxu0 0
        %1740 = vmatpush1.bf16.msra.mxu0 0
        %1741 = vmatprep.subr.bf16.mxu0 0
        %1742 = vmatpush1.bf16.msra.mxu0 0
        %1743 = vmatprep.mubr.bf16.mxu0 0
        %1744 = vmatmul.mubr.bf16.gmra.mrb[0].mxu0 %v1269
        %v1745 = vpop.f32.mrb[0].mxu0
        %v1746 = vadd.f32 %v1661, %v1745
        %v1747 = vpop.f32.mrb[0].mxu0
        %v1748 = vpop.f32.mrb[0].mxu0
        %v1749 = vadd.f32 %v1661, %v1748
        %v1750 = vpop.f32.mrb[0].mxu0
        %1751 = vdwg.mxu0
        %v1752 = vadd.f32 %v1636, %v1746
        %v1753 = vadd.f32 %v1637, %v1749
        %v1754 = vmax.f32 %v1752, 0.0
        %v1755 = vmax.f32 %v1753, 0.0
        %1756 = vst [vmem:[%s340] sm:$0xff] %v1754
        %1757 = vst [vmem:[%s340 + $0x8] sm:$0xff] %v1755
        %s1758 = sand.u32 %s186, 1
        %s1759 = scalar_lea.sflag [#allocation4], %s1758
        %s1760 = sand.u32 %s186, 1
        %s1761 = smul.addr %s1760, 16
        %s1762 = scalar_lea.vmem [#allocation10], %s1761
        // Predicated region
        $region65: #{tpu_custom_call.1} parent=47 // pred_check
          %p1763 = pneg %p196
        $region66: #{tpu_custom_call.1} parent=47 // pred_check_branch
          %1765 = sbr.rel (%p1763) target = $region68
        $region67: #{tpu_custom_call.1} parent=47 // pred_region
          %s1766 = smul.u32 2, %s26
          %s1768 = ssub.s32 256, 256
          %1769 = vsyncadd %s1759, %s1768
          %s1770 = smul.addr %s1766, 128
          %s1771 = scalar_lea.hbm %s7, %s1770
          %s1772 = sshll.u32 %s1762, 4
          %s1773 = int_to_ptr.vmem [resolvable:$true] %s1772
          %1778 = dma.vmem_to_hbm [thread:$0]  %s1773, 256, %s1771, %s1759, 128, 128, 8
        $region68: #{tpu_custom_call.1} parent=47 // pred_fallthru
          _
      $region48: #{tpu_custom_call.1} parent=5 // pred_fallthru
        _
      %p1779 = scmp.le.s32.totalorder 2, %s21
      // Predicated region
      $region69: #{tpu_custom_call.1} parent=5 // pred_check
        %p1780 = pneg %p1779
      $region70: #{tpu_custom_call.1} parent=5 // pred_check_branch
        %1782 = sbr.rel (%p1780) target = $region72
      $region71: #{tpu_custom_call.1} parent=5 // pred_region
        %s1783 = ssub.s32 %s21, 2
        // Predicated region
        $region73: #{tpu_custom_call.1} parent=71 // pred_check
          %p1784 = pneg %p202
        $region74: #{tpu_custom_call.1} parent=71 // pred_check_branch
          %1786 = sbr.rel (%p1784) target = $region76
        $region75: #{tpu_custom_call.1} parent=71 // pred_region
          %s1787 = sand.u32 %s187, 1
          %s1788 = scalar_lea.sflag [#allocation4], %s1787
          %s1789 = sand.u32 %s187, 1
          %s1790 = smul.addr %s1789, 16
          %s1791 = scalar_lea.vmem [#allocation10], %s1790
          %1792 = dma.done %s1788, 256
        $region76: #{tpu_custom_call.1} parent=71 // pred_fallthru
          _
      $region72: #{tpu_custom_call.1} parent=5 // pred_fallthru
        _
    $region6: #{tpu_custom_call.1} parent=1 // loop_footer
      %s25 = sadd.s32 1, %s21
    $region7: #{tpu_custom_call.1} parent=1 // loop_footer_branch
      %20 = sbr.rel target = $region3
    $region8: #{tpu_custom_call.1} parent=1 // loop_exit
      _
    %1793 = vsyncpa [#allocation3], 1
    %s1794 = scalar_lea.sflag [#allocation3], 1
    %1795 = vsyncpa %s1794, 1
    %1796 = vsyncpa [#allocation6], 1
    %1797 = vsyncpa [#allocation9], 1
    %1798 = vsyncpa [#allocation4], 1
    %s1799 = scalar_lea.sflag [#allocation4], 1
    %1800 = vsyncpa %s1799, 1

</llo_original>
